<compile_context>
chip_gen: v6e
topology: v6e:2x2x1
jax: 0.10.0
libtpu: 0.0.40
codegen_flags: <defaults>
</compile_context>

<pallas_src>
import jax
import jax.numpy as jnp
import numpy as np
from jax.experimental import pallas as pl
from jax.experimental.pallas import tpu as pltpu

EPS = 1e-5                      # PyTorch BatchNorm default eps
VMEM_LIMIT = 32 * 1024 * 1024   # explicit, safe on v5e/v6e/v7x (v7x: 64 MiB phys)


# ----------------------------- Pallas kernels ------------------------------ #

def _proj_pool_kernel(x_ref, wp_ref, bp_ref, wg_ref, bg_ref, phi_ref, g_ref):
    """phi / g 1x1x1 convs with the 2x2x2 max-pool fused in.

    x is window-major: rows 8m .. 8m+7 of the tile are the 8 voxels of pooled
    cell m, so the pool is a max over the middle axis of a (TN//8, 8, Ci)
    reshape.  The reshape only splits the sublane dim by its native factor of
    8, so it is layout-preserving; the reduction is a cheap sublane max.
    """
    x = x_ref[0]                                                    # (TN, C)
    phi = jnp.dot(x, wp_ref[...], preferred_element_type=jnp.float32) + bp_ref[...]
    g = jnp.dot(x, wg_ref[...], preferred_element_type=jnp.float32) + bg_ref[...]
    tn, ci = phi.shape
    phi_ref[0] = jnp.max(phi.reshape(tn // 8, 8, ci), axis=1)       # (TN//8, Ci)
    g_ref[0] = jnp.max(g.reshape(tn // 8, 8, ci), axis=1)           # (TN//8, Ci)


def _attn_kernel(x_ref, phi_ref, g_ref,
                 wt_ref, bt_ref, ww_ref, bw_ref, scale_ref, shift_ref,
                 out_ref):
    """Per query-tile: recompute theta, attention over the resident pooled
    phi/g, W 1x1x1 conv, folded BatchNorm, residual add."""
    x = x_ref[0]                                                    # (TQ, C)

    # theta recomputed from the x tile (never round-tripped through HBM).
    theta = (jnp.dot(x, wt_ref[...], preferred_element_type=jnp.float32)
             + bt_ref[...])                                         # (TQ, Ci)

    phi = phi_ref[0]                                                # (Np, Ci)
    g = g_ref[0]                                                    # (Np, Ci)

    # f = theta @ phi^T : contract the inter-channel dim -> (TQ, Np)
    f = jax.lax.dot_general(theta, phi, (((1,), (1,)), ((), ())),
                            preferred_element_type=jnp.float32)

    # softmax over the (fully resident) kv axis
    f = f - jnp.max(f, axis=-1, keepdims=True)
    p = jnp.exp(f)
    denom = jnp.sum(p, axis=-1, keepdims=True)
    # exact reciprocal keeps the correctness check tight; flip approx=True to
    # push the divide onto the otherwise-idle EUP if ~1e-4 rel error is OK.
    p = p * pl.reciprocal(denom, approx=False)

    # y = softmax(f) @ g -> (TQ, Ci)
    y = jnp.dot(p, g, preferred_element_type=jnp.float32)

    # W 1x1x1 conv, then BatchNorm folded into one FMA, then residual.
    wy = (jnp.dot(y, ww_ref[...], preferred_element_type=jnp.float32)
          + bw_ref[...])                                            # (TQ, C)
    out_ref[0] = wy * scale_ref[...] + shift_ref[...] + x


# ----------------------- layout helpers (wrapper side) ---------------------- #

def _to_window_major(x):
    """(B, C, T, H, W) -> (B, N, C) with every 8 consecutive N-rows forming one
    2x2x2 pooling window (window-major permutation of the T*H*W axis)."""
    B, C, T, H, W = x.shape
    x = x.reshape(B, C, T // 2, 2, H // 2, 2, W // 2, 2)
    x = x.transpose(0, 2, 4, 6, 3, 5, 7, 1)       # (B, T/2, H/2, W/2, 2,2,2, C)
    return x.reshape(B, T * H * W, C)


def _from_window_major(z_flat, B, C, T, H, W):
    z = z_flat.reshape(B, T // 2, H // 2, W // 2, 2, 2, 2, C)
    z = z.transpose(0, 7, 1, 4, 2, 5, 3, 6)       # (B, C, T/2,2, H/2,2, W/2,2)
    return z.reshape(B, C, T, H, W)


# --------------------------------- wrapper ---------------------------------- #

@jax.jit
def context_voted_forward(x, params):
    """x: (B, C, T, H, W) float32 (PyTorch NCDHW). Returns z of same shape."""
    B, C, T, H, W = x.shape
    assert T % 2 == 0 and H % 2 == 0 and W % 2 == 0, \
        "MaxPool3d(kernel_size=2) path assumes even T/H/W"
    Ci = params["w_theta"].shape[1]
    N = T * H * W
    Np = N // 8

    TN = 128 if N % 128 == 0 else N               # query/projection row tile
    assert N % TN == 0 and TN % 8 == 0
    TNP = TN // 8

    x_flat = _to_window_major(x)                  # (B, N, C), window-major N

    # Fold BatchNorm (eval: running stats + affine) into a single scale/shift.
    inv_std = jax.lax.rsqrt(params["bn_var"] + EPS)
    bn_scale = params["bn_gamma"] * inv_std                        # (1, C)
    bn_shift = params["bn_beta"] - params["bn_mean"] * bn_scale    # (1, C)

    def full(shape):          # constant-index (resident) operand
        return pl.BlockSpec(shape, lambda b, n: (0,) * len(shape))

    cparams = pltpu.CompilerParams(
        dimension_semantics=("parallel", "parallel"),
        vmem_limit_bytes=VMEM_LIMIT)

    # --- kernel A: phi / g projections with fused 2x2x2 max-pool -----------
    phi_p, g_p = pl.pallas_call(
        _proj_pool_kernel,
        grid=(B, N // TN),
        in_specs=[pl.BlockSpec((1, TN, C), lambda b, n: (b, n, 0)),
                  full((C, Ci)), full((1, Ci)),
                  full((C, Ci)), full((1, Ci))],
        out_specs=[pl.BlockSpec((1, TNP, Ci), lambda b, n: (b, n, 0)),
                   pl.BlockSpec((1, TNP, Ci), lambda b, n: (b, n, 0))],
        out_shape=[jax.ShapeDtypeStruct((B, Np, Ci), jnp.float32)] * 2,
        compiler_params=cparams,
    )(x_flat,
      params["w_phi"], params["b_phi"],
      params["w_g"], params["b_g"])

    # --- kernel B: theta (recomputed) + attention + W conv + BN + residual --
    z_flat = pl.pallas_call(
        _attn_kernel,
        grid=(B, N // TN),
        in_specs=[pl.BlockSpec((1, TN, C), lambda b, n: (b, n, 0)),   # x tile
                  pl.BlockSpec((1, Np, Ci), lambda b, n: (b, 0, 0)),  # phi_p (resident per b)
                  pl.BlockSpec((1, Np, Ci), lambda b, n: (b, 0, 0)),  # g_p   (resident per b)
                  full((C, Ci)), full((1, Ci)),
                  full((Ci, C)), full((1, C)),
                  full((1, C)), full((1, C))],
        out_specs=pl.BlockSpec((1, TN, C), lambda b, n: (b, n, 0)),
        out_shape=jax.ShapeDtypeStruct((B, N, C), jnp.float32),
        input_output_aliases={0: 0},              # reuse x_flat's HBM buffer
        compiler_params=cparams,
    )(x_flat, phi_p, g_p,
      params["w_theta"], params["b_theta"],
      params["w_W"], params["b_W"],
      bn_scale, bn_shift)

    return _from_window_major(z_flat, B, C, T, H, W)


# ----------------------------- pure-JAX reference --------------------------- #

def reference(x, p):
    B, C, T, H, W = x.shape
    Ci = p["w_theta"].shape[1]
    with jax.default_matmul_precision("highest"):
        xf = jnp.transpose(x, (0, 2, 3, 4, 1)).reshape(B, -1, C)
        th = xf @ p["w_theta"] + p["b_theta"]
        ph = xf @ p["w_phi"] + p["b_phi"]
        g = xf @ p["w_g"] + p["b_g"]

        def pool(a):
            a = a.reshape(B, T // 2, 2, H // 2, 2, W // 2, 2, Ci)
            return jnp.max(a, axis=(2, 4, 6)).reshape(B, -1, Ci)

        ph, g = pool(ph), pool(g)
        f = jnp.einsum("bnc,bmc->bnm", th, ph)
        att = jax.nn.softmax(f, axis=-1)
        y = jnp.einsum("bnm,bmc->bnc", att, g)
        wy = y @ p["w_W"] + p["b_W"]
        bn = ((wy - p["bn_mean"]) * jax.lax.rsqrt(p["bn_var"] + EPS)
              * p["bn_gamma"] + p["bn_beta"])
        zf = bn + xf
    return zf.reshape(B, T, H, W, C).transpose(0, 4, 1, 2, 3)


# ------------------------------------ main ----------------------------------- #

if __name__ == "__main__":
    key = jax.random.PRNGKey(0)
    # Small but lane-friendly shapes: C multiple of 128, Ci multiple of 64,
    # N = T*H*W = 256 (even T/H/W for the 2x2x2 pool).
    B, C, T, H, W = 2, 128, 4, 8, 8
    Ci = C // 2                                    # inter_channels

    keys = jax.random.split(key, 13)

    def uinit(k, shape, fan_in):
        bound = 1.0 / float(np.sqrt(fan_in))
        return jax.random.uniform(k, shape, jnp.float32, -bound, bound)

    # Conv weights stored as (in, out) so the 1x1x1 conv is x_flat @ W.
    # NOTE: the module zero-initializes BN gamma/beta (making z == x at init);
    # here we use nonzero gamma/beta/mean/var so the correctness check actually
    # exercises the attention / W / BN path numerically.
    params = dict(
        w_theta=uinit(keys[0], (C, Ci), C), b_theta=uinit(keys[1], (1, Ci), C),
        w_phi=uinit(keys[2], (C, Ci), C),   b_phi=uinit(keys[3], (1, Ci), C),
        w_g=uinit(keys[4], (C, Ci), C),     b_g=uinit(keys[5], (1, Ci), C),
        w_W=uinit(keys[6], (Ci, C), Ci),    b_W=uinit(keys[7], (1, C), Ci),
        bn_gamma=jax.random.normal(keys[8], (1, C), jnp.float32),
        bn_beta=jax.random.normal(keys[9], (1, C), jnp.float32),
        bn_mean=0.1 * jax.random.normal(keys[10], (1, C), jnp.float32),
        bn_var=jax.random.uniform(keys[11], (1, C), jnp.float32, 0.5, 1.5),
    )

    x = jax.random.normal(keys[12], (B, C, T, H, W), jnp.float32)

    z = context_voted_forward(x, params)
    jax.block_until_ready(z)

    z_ref = reference(x, params)
    assert z.shape == x.shape
    # Tolerance leaves headroom for MXU f32 precision modes while still
    # catching any structural / layout / permutation error (which would be
    # O(0.1) or larger).
    np.testing.assert_allclose(np.asarray(z), np.asarray(z_ref),
                               rtol=3e-3, atol=3e-3)

    print("KERNEL_OK")
</pallas_src>

<mosaic_0001>
module attributes {stable_mosaic.version = 11 : i64} {
  func.func @_proj_pool_kernel(%arg0: i32, %arg1: i32, %arg2: memref<1x128x128xf32, #tpu.memory_space<vmem>>, %arg3: memref<128x64xf32, #tpu.memory_space<vmem>>, %arg4: memref<1x64xf32, #tpu.memory_space<vmem>>, %arg5: memref<128x64xf32, #tpu.memory_space<vmem>>, %arg6: memref<1x64xf32, #tpu.memory_space<vmem>>, %arg7: memref<1x16x64xf32, #tpu.memory_space<vmem>>, %arg8: memref<1x16x64xf32, #tpu.memory_space<vmem>>) attributes {dimension_semantics = [#tpu.dimension_semantics<parallel>, #tpu.dimension_semantics<parallel>], iteration_bounds = array<i64: 2, 2>, scalar_prefetch = 0 : i64, scratch_operands = 0 : i64, tpu.core_type = #tpu.core_type<tc>, window_params = [{transform_indices = @transform_0, window_bounds = array<i64: 1, 128, 128>}, {pipeline_mode = #tpu.pipeline_mode<synchronous>, transform_indices = @transform_1, window_bounds = array<i64: 128, 64>}, {pipeline_mode = #tpu.pipeline_mode<synchronous>, transform_indices = @transform_2, window_bounds = array<i64: 1, 64>}, {pipeline_mode = #tpu.pipeline_mode<synchronous>, transform_indices = @transform_3, window_bounds = array<i64: 128, 64>}, {pipeline_mode = #tpu.pipeline_mode<synchronous>, transform_indices = @transform_4, window_bounds = array<i64: 1, 64>}, {transform_indices = @transform_5, window_bounds = array<i64: 1, 16, 64>}, {transform_indices = @transform_6, window_bounds = array<i64: 1, 16, 64>}]} {
    %c0 = arith.constant 0 : index
    %c0_0 = arith.constant 0 : index
    %c0_1 = arith.constant 0 : index
    %0 = vector.load %arg2[%c0, %c0_0, %c0_1] : memref<1x128x128xf32, #tpu.memory_space<vmem>>, vector<1x128x128xf32>
    %1 = vector.shape_cast %0 : vector<1x128x128xf32> to vector<128x128xf32>
    %c0_2 = arith.constant 0 : index
    %c0_3 = arith.constant 0 : index
    %2 = vector.load %arg3[%c0_2, %c0_3] : memref<128x64xf32, #tpu.memory_space<vmem>>, vector<128x64xf32>
    %cst = arith.constant dense<0.000000e+00> : vector<128x64xf32>
    %3 = tpu.matmul %1, %2, %cst {dimension_numbers = #tpu.dot_dimension_numbers<[1], [0], [0], [1], [0, 0, 1, 1], [], []>} : vector<128x128xf32>, vector<128x64xf32>, vector<128x64xf32> -> vector<128x64xf32>
    %c0_4 = arith.constant 0 : index
    %c0_5 = arith.constant 0 : index
    %4 = vector.load %arg4[%c0_4, %c0_5] : memref<1x64xf32, #tpu.memory_space<vmem>>, vector<1x64xf32>
    %5 = vector.broadcast %4 : vector<1x64xf32> to vector<128x64xf32>
    %6 = arith.addf %3, %5 : vector<128x64xf32>
    %c0_6 = arith.constant 0 : index
    %c0_7 = arith.constant 0 : index
    %7 = vector.load %arg5[%c0_6, %c0_7] : memref<128x64xf32, #tpu.memory_space<vmem>>, vector<128x64xf32>
    %cst_8 = arith.constant dense<0.000000e+00> : vector<128x64xf32>
    %8 = tpu.matmul %1, %7, %cst_8 {dimension_numbers = #tpu.dot_dimension_numbers<[1], [0], [0], [1], [0, 0, 1, 1], [], []>} : vector<128x128xf32>, vector<128x64xf32>, vector<128x64xf32> -> vector<128x64xf32>
    %c0_9 = arith.constant 0 : index
    %c0_10 = arith.constant 0 : index
    %9 = vector.load %arg6[%c0_9, %c0_10] : memref<1x64xf32, #tpu.memory_space<vmem>>, vector<1x64xf32>
    %10 = vector.broadcast %9 : vector<1x64xf32> to vector<128x64xf32>
    %11 = arith.addf %8, %10 : vector<128x64xf32>
    %12 = vector.shape_cast %6 : vector<128x64xf32> to vector<16x8x64xf32>
    %cst_11 = arith.constant dense<0xFF800000> : vector<16x64xf32>
    %13 = vector.multi_reduction <maximumf>, %12, %cst_11 [1] : vector<16x8x64xf32> to vector<16x64xf32>
    %c0_12 = arith.constant 0 : index
    %c0_13 = arith.constant 0 : index
    %c0_14 = arith.constant 0 : index
    %14 = vector.load %arg7[%c0_12, %c0_13, %c0_14] : memref<1x16x64xf32, #tpu.memory_space<vmem>>, vector<1x16x64xf32>
    %15 = vector.shape_cast %14 : vector<1x16x64xf32> to vector<16x64xf32>
    %16 = vector.shape_cast %13 : vector<16x64xf32> to vector<1x16x64xf32>
    tpu.vector_store %arg7[%c0_12, %c0_13, %c0_14], %16 {strides = array<i32>} : memref<1x16x64xf32, #tpu.memory_space<vmem>>, vector<1x16x64xf32>,
    %17 = vector.shape_cast %11 : vector<128x64xf32> to vector<16x8x64xf32>
    %cst_15 = arith.constant dense<0xFF800000> : vector<16x64xf32>
    %18 = vector.multi_reduction <maximumf>, %17, %cst_15 [1] : vector<16x8x64xf32> to vector<16x64xf32>
    %c0_16 = arith.constant 0 : index
    %c0_17 = arith.constant 0 : index
    %c0_18 = arith.constant 0 : index
    %19 = vector.load %arg8[%c0_16, %c0_17, %c0_18] : memref<1x16x64xf32, #tpu.memory_space<vmem>>, vector<1x16x64xf32>
    %20 = vector.shape_cast %19 : vector<1x16x64xf32> to vector<16x64xf32>
    %21 = vector.shape_cast %18 : vector<16x64xf32> to vector<1x16x64xf32>
    tpu.vector_store %arg8[%c0_16, %c0_17, %c0_18], %21 {strides = array<i32>} : memref<1x16x64xf32, #tpu.memory_space<vmem>>, vector<1x16x64xf32>,
    return
  }
  func.func @transform_0(%arg0: i32, %arg1: i32) -> (i32, i32, i32) {
    %c0_i32 = arith.constant 0 : i32
    %c0_i32_0 = arith.constant 0 : i32
    return %arg0, %arg1, %c0_i32 : i32, i32, i32
  }
  func.func @transform_1(%arg0: i32, %arg1: i32) -> (i32, i32) {
    %c0_i32 = arith.constant 0 : i32
    %c0_i32_0 = arith.constant 0 : i32
    %c0_i32_1 = arith.constant 0 : i32
    return %c0_i32, %c0_i32_0 : i32, i32
  }
  func.func @transform_2(%arg0: i32, %arg1: i32) -> (i32, i32) {
    %c0_i32 = arith.constant 0 : i32
    %c0_i32_0 = arith.constant 0 : i32
    %c0_i32_1 = arith.constant 0 : i32
    return %c0_i32, %c0_i32_0 : i32, i32
  }
  func.func @transform_3(%arg0: i32, %arg1: i32) -> (i32, i32) {
    %c0_i32 = arith.constant 0 : i32
    %c0_i32_0 = arith.constant 0 : i32
    %c0_i32_1 = arith.constant 0 : i32
    return %c0_i32, %c0_i32_0 : i32, i32
  }
  func.func @transform_4(%arg0: i32, %arg1: i32) -> (i32, i32) {
    %c0_i32 = arith.constant 0 : i32
    %c0_i32_0 = arith.constant 0 : i32
    %c0_i32_1 = arith.constant 0 : i32
    return %c0_i32, %c0_i32_0 : i32, i32
  }
  func.func @transform_5(%arg0: i32, %arg1: i32) -> (i32, i32, i32) {
    %c0_i32 = arith.constant 0 : i32
    %c0_i32_0 = arith.constant 0 : i32
    return %arg0, %arg1, %c0_i32 : i32, i32, i32
  }
  func.func @transform_6(%arg0: i32, %arg1: i32) -> (i32, i32, i32) {
    %c0_i32 = arith.constant 0 : i32
    %c0_i32_0 = arith.constant 0 : i32
    return %arg0, %arg1, %c0_i32 : i32, i32, i32
  }
}

module attributes {stable_mosaic.version = 11 : i64} {
  func.func @_attn_kernel(%arg0: i32, %arg1: i32, %arg2: memref<1x128x128xf32, #tpu.memory_space<vmem>>, %arg3: memref<1x32x64xf32, #tpu.memory_space<vmem>>, %arg4: memref<1x32x64xf32, #tpu.memory_space<vmem>>, %arg5: memref<128x64xf32, #tpu.memory_space<vmem>>, %arg6: memref<1x64xf32, #tpu.memory_space<vmem>>, %arg7: memref<64x128xf32, #tpu.memory_space<vmem>>, %arg8: memref<1x128xf32, #tpu.memory_space<vmem>>, %arg9: memref<1x128xf32, #tpu.memory_space<vmem>>, %arg10: memref<1x128xf32, #tpu.memory_space<vmem>>, %arg11: memref<1x128x128xf32, #tpu.memory_space<vmem>>) attributes {dimension_semantics = [#tpu.dimension_semantics<parallel>, #tpu.dimension_semantics<parallel>], iteration_bounds = array<i64: 2, 2>, scalar_prefetch = 0 : i64, scratch_operands = 0 : i64, tpu.core_type = #tpu.core_type<tc>, window_params = [{transform_indices = @transform_0, window_bounds = array<i64: 1, 128, 128>}, {transform_indices = @transform_1, window_bounds = array<i64: 1, 32, 64>}, {transform_indices = @transform_2, window_bounds = array<i64: 1, 32, 64>}, {pipeline_mode = #tpu.pipeline_mode<synchronous>, transform_indices = @transform_3, window_bounds = array<i64: 128, 64>}, {pipeline_mode = #tpu.pipeline_mode<synchronous>, transform_indices = @transform_4, window_bounds = array<i64: 1, 64>}, {pipeline_mode = #tpu.pipeline_mode<synchronous>, transform_indices = @transform_5, window_bounds = array<i64: 64, 128>}, {pipeline_mode = #tpu.pipeline_mode<synchronous>, transform_indices = @transform_6, window_bounds = array<i64: 1, 128>}, {pipeline_mode = #tpu.pipeline_mode<synchronous>, transform_indices = @transform_7, window_bounds = array<i64: 1, 128>}, {pipeline_mode = #tpu.pipeline_mode<synchronous>, transform_indices = @transform_8, window_bounds = array<i64: 1, 128>}, {transform_indices = @transform_9, window_bounds = array<i64: 1, 128, 128>}]} {
    %c0 = arith.constant 0 : index
    %c0_0 = arith.constant 0 : index
    %c0_1 = arith.constant 0 : index
    %0 = vector.load %arg2[%c0, %c0_0, %c0_1] : memref<1x128x128xf32, #tpu.memory_space<vmem>>, vector<1x128x128xf32>
    %1 = vector.shape_cast %0 : vector<1x128x128xf32> to vector<128x128xf32>
    %c0_2 = arith.constant 0 : index
    %c0_3 = arith.constant 0 : index
    %2 = vector.load %arg5[%c0_2, %c0_3] : memref<128x64xf32, #tpu.memory_space<vmem>>, vector<128x64xf32>
    %cst = arith.constant dense<0.000000e+00> : vector<128x64xf32>
    %3 = tpu.matmul %1, %2, %cst {dimension_numbers = #tpu.dot_dimension_numbers<[1], [0], [0], [1], [0, 0, 1, 1], [], []>} : vector<128x128xf32>, vector<128x64xf32>, vector<128x64xf32> -> vector<128x64xf32>
    %c0_4 = arith.constant 0 : index
    %c0_5 = arith.constant 0 : index
    %4 = vector.load %arg6[%c0_4, %c0_5] : memref<1x64xf32, #tpu.memory_space<vmem>>, vector<1x64xf32>
    %5 = vector.broadcast %4 : vector<1x64xf32> to vector<128x64xf32>
    %6 = arith.addf %3, %5 : vector<128x64xf32>
    %c0_6 = arith.constant 0 : index
    %c0_7 = arith.constant 0 : index
    %c0_8 = arith.constant 0 : index
    %7 = vector.load %arg3[%c0_6, %c0_7, %c0_8] : memref<1x32x64xf32, #tpu.memory_space<vmem>>, vector<1x32x64xf32>
    %8 = vector.shape_cast %7 : vector<1x32x64xf32> to vector<32x64xf32>
    %c0_9 = arith.constant 0 : index
    %c0_10 = arith.constant 0 : index
    %c0_11 = arith.constant 0 : index
    %9 = vector.load %arg4[%c0_9, %c0_10, %c0_11] : memref<1x32x64xf32, #tpu.memory_space<vmem>>, vector<1x32x64xf32>
    %10 = vector.shape_cast %9 : vector<1x32x64xf32> to vector<32x64xf32>
    %cst_12 = arith.constant dense<0.000000e+00> : vector<128x32xf32>
    %11 = tpu.matmul %6, %8, %cst_12 {dimension_numbers = #tpu.dot_dimension_numbers<[1], [1], [0], [0], [0, 0, 1, 0], [], []>} : vector<128x64xf32>, vector<32x64xf32>, vector<128x32xf32> -> vector<128x32xf32>
    %cst_13 = arith.constant dense<0xFF800000> : vector<128xf32>
    %12 = vector.multi_reduction <maximumf>, %11, %cst_13 [1] : vector<128x32xf32> to vector<128xf32>
    %13 = vector.shape_cast %12 : vector<128xf32> to vector<128x1xf32>
    %14 = vector.broadcast %13 : vector<128x1xf32> to vector<128x32xf32>
    %15 = arith.subf %11, %14 : vector<128x32xf32>
    %16 = math.exp %15 : vector<128x32xf32>
    %cst_14 = arith.constant dense<0.000000e+00> : vector<128xf32>
    %17 = vector.multi_reduction <add>, %16, %cst_14 [1] : vector<128x32xf32> to vector<128xf32>
    %18 = vector.shape_cast %17 : vector<128xf32> to vector<128x1xf32>
    %19 = tpu.reciprocal %18 : vector<128x1xf32> -> vector<128x1xf32>
    %20 = vector.broadcast %19 : vector<128x1xf32> to vector<128x32xf32>
    %21 = arith.mulf %16, %20 : vector<128x32xf32>
    %cst_15 = arith.constant dense<0.000000e+00> : vector<128x64xf32>
    %22 = tpu.matmul %21, %10, %cst_15 {dimension_numbers = #tpu.dot_dimension_numbers<[1], [0], [0], [1], [0, 0, 1, 1], [], []>} : vector<128x32xf32>, vector<32x64xf32>, vector<128x64xf32> -> vector<128x64xf32>
    %c0_16 = arith.constant 0 : index
    %c0_17 = arith.constant 0 : index
    %23 = vector.load %arg7[%c0_16, %c0_17] : memref<64x128xf32, #tpu.memory_space<vmem>>, vector<64x128xf32>
    %cst_18 = arith.constant dense<0.000000e+00> : vector<128x128xf32>
    %24 = tpu.matmul %22, %23, %cst_18 {dimension_numbers = #tpu.dot_dimension_numbers<[1], [0], [0], [1], [0, 0, 1, 1], [], []>} : vector<128x64xf32>, vector<64x128xf32>, vector<128x128xf32> -> vector<128x128xf32>
    %c0_19 = arith.constant 0 : index
    %c0_20 = arith.constant 0 : index
    %25 = vector.load %arg8[%c0_19, %c0_20] : memref<1x128xf32, #tpu.memory_space<vmem>>, vector<1x128xf32>
    %26 = vector.broadcast %25 : vector<1x128xf32> to vector<128x128xf32>
    %27 = arith.addf %24, %26 : vector<128x128xf32>
    %c0_21 = arith.constant 0 : index
    %c0_22 = arith.constant 0 : index
    %28 = vector.load %arg9[%c0_21, %c0_22] : memref<1x128xf32, #tpu.memory_space<vmem>>, vector<1x128xf32>
    %29 = vector.broadcast %28 : vector<1x128xf32> to vector<128x128xf32>
    %30 = arith.mulf %27, %29 : vector<128x128xf32>
    %c0_23 = arith.constant 0 : index
    %c0_24 = arith.constant 0 : index
    %31 = vector.load %arg10[%c0_23, %c0_24] : memref<1x128xf32, #tpu.memory_space<vmem>>, vector<1x128xf32>
    %32 = vector.broadcast %31 : vector<1x128xf32> to vector<128x128xf32>
    %33 = arith.addf %30, %32 : vector<128x128xf32>
    %34 = arith.addf %33, %1 : vector<128x128xf32>
    %c0_25 = arith.constant 0 : index
    %c0_26 = arith.constant 0 : index
    %c0_27 = arith.constant 0 : index
    %35 = vector.load %arg11[%c0_25, %c0_26, %c0_27] : memref<1x128x128xf32, #tpu.memory_space<vmem>>, vector<1x128x128xf32>
    %36 = vector.shape_cast %35 : vector<1x128x128xf32> to vector<128x128xf32>
    %37 = vector.shape_cast %34 : vector<128x128xf32> to vector<1x128x128xf32>
    tpu.vector_store %arg11[%c0_25, %c0_26, %c0_27], %37 {strides = array<i32>} : memref<1x128x128xf32, #tpu.memory_space<vmem>>, vector<1x128x128xf32>,
    return
  }
  func.func @transform_0(%arg0: i32, %arg1: i32) -> (i32, i32, i32) {
    %c0_i32 = arith.constant 0 : i32
    %c0_i32_0 = arith.constant 0 : i32
    return %arg0, %arg1, %c0_i32 : i32, i32, i32
  }
  func.func @transform_1(%arg0: i32, %arg1: i32) -> (i32, i32, i32) {
    %c0_i32 = arith.constant 0 : i32
    %c0_i32_0 = arith.constant 0 : i32
    %c0_i32_1 = arith.constant 0 : i32
    return %arg0, %c0_i32, %c0_i32_0 : i32, i32, i32
  }
  func.func @transform_2(%arg0: i32, %arg1: i32) -> (i32, i32, i32) {
    %c0_i32 = arith.constant 0 : i32
    %c0_i32_0 = arith.constant 0 : i32
    %c0_i32_1 = arith.constant 0 : i32
    return %arg0, %c0_i32, %c0_i32_0 : i32, i32, i32
  }
  func.func @transform_3(%arg0: i32, %arg1: i32) -> (i32, i32) {
    %c0_i32 = arith.constant 0 : i32
    %c0_i32_0 = arith.constant 0 : i32
    %c0_i32_1 = arith.constant 0 : i32
    return %c0_i32, %c0_i32_0 : i32, i32
  }
  func.func @transform_4(%arg0: i32, %arg1: i32) -> (i32, i32) {
    %c0_i32 = arith.constant 0 : i32
    %c0_i32_0 = arith.constant 0 : i32
    %c0_i32_1 = arith.constant 0 : i32
    return %c0_i32, %c0_i32_0 : i32, i32
  }
  func.func @transform_5(%arg0: i32, %arg1: i32) -> (i32, i32) {
    %c0_i32 = arith.constant 0 : i32
    %c0_i32_0 = arith.constant 0 : i32
    %c0_i32_1 = arith.constant 0 : i32
    return %c0_i32, %c0_i32_0 : i32, i32
  }
  func.func @transform_6(%arg0: i32, %arg1: i32) -> (i32, i32) {
    %c0_i32 = arith.constant 0 : i32
    %c0_i32_0 = arith.constant 0 : i32
    %c0_i32_1 = arith.constant 0 : i32
    return %c0_i32, %c0_i32_0 : i32, i32
  }
  func.func @transform_7(%arg0: i32, %arg1: i32) -> (i32, i32) {
    %c0_i32 = arith.constant 0 : i32
    %c0_i32_0 = arith.constant 0 : i32
    %c0_i32_1 = arith.constant 0 : i32
    return %c0_i32, %c0_i32_0 : i32, i32
  }
  func.func @transform_8(%arg0: i32, %arg1: i32) -> (i32, i32) {
    %c0_i32 = arith.constant 0 : i32
    %c0_i32_0 = arith.constant 0 : i32
    %c0_i32_1 = arith.constant 0 : i32
    return %c0_i32, %c0_i32_0 : i32, i32
  }
  func.func @transform_9(%arg0: i32, %arg1: i32) -> (i32, i32, i32) {
    %c0_i32 = arith.constant 0 : i32
    %c0_i32_0 = arith.constant 0 : i32
    return %arg0, %arg1, %c0_i32 : i32, i32, i32
  }
}

</mosaic_0001>

<llo_original>
// kernel: context_voted_forward.2
$region0: #{context_voted_forward.2}
  #allocation0 [shape = 'u32[]', space=smem, size = 0x4, offset = 0x4, fixed_abs, tag = 'smem constant byte address 0x4 - core index']
  #allocation1 [shape = 'u32[144,128]{1,0:T(1,128)}', space=vmem, size = 0x12000, scoped, tag = 'internal scratch']
  %s0 = inlined_call_operand.vmem [shape: f32[2,256,128], index: 0, kind: input, shape index: {}]
  %s1 = inlined_call_operand.vmem [shape: f32[128,64], index: 1, kind: input, shape index: {}]
  %s2 = inlined_call_operand.vmem [shape: f32[1,64], index: 2, kind: input, shape index: {}]
  %s3 = inlined_call_operand.vmem [shape: f32[128,64], index: 3, kind: input, shape index: {}]
  %s4 = inlined_call_operand.vmem [shape: f32[1,64], index: 4, kind: input, shape index: {}]
  %s5 = inlined_call_operand.vmem [shape: f32[2,32,64], index: 5, kind: output, shape index: {0}]
  %s6 = inlined_call_operand.vmem [shape: f32[2,32,64], index: 6, kind: output, shape index: {1}]
  %7 = xla_tuple %s5, %s6
  %s8 = sld [smem:[#allocation0]]
  $region61: #{context_voted_forward.2} parent=0
    _
  %s10 = ssub.s32 1, %s8
  %s11 = scalar_select 0, %s10, %s8
  loop: start=0, step=1, limit=6
  $region2: #{context_voted_forward.2} parent=0 // loop_pre_header
    _
  $region3: #{context_voted_forward.2} parent=0 // loop_header
    %s13 = sphi 0, %s17
    %p14 = scmp.ge.s32.totalorder %s13, 6
    %s20 = sphi 0, %s32
    %s21 = sphi 0, %s28
    %s22 = sphi 0, %s20
    %s23 = sphi 0, %s21
    %s24 = sphi 0, %s22
    %s25 = sphi 0, %s23
    %s37 = sphi 0, %s39
    %s40 = sphi 0, %s37
    %s41 = sphi 0, %s40
    %s57 = sphi 0, %s41
    %s61 = sphi 0, %s61
    %s63 = sphi 0, %s61
    %s64 = sphi 0, %s63
    %s78 = sphi 0, %s64
    %s82 = sphi 0, %s82
    %s84 = sphi 0, %s82
    %s85 = sphi 0, %s84
    %s99 = sphi 0, %s85
    %s103 = sphi 0, %s103
    %s105 = sphi 0, %s103
    %s106 = sphi 0, %s105
    %s120 = sphi 0, %s106
    %s124 = sphi 0, %s124
    %s126 = sphi 0, %s124
    %s127 = sphi 0, %s126
    %s141 = sphi 0, %s127
    %s149 = sphi 0, %s151
    %s152 = sphi 0, %s149
    %s153 = sphi 0, %s152
    %s169 = sphi 0, %s153
    %s177 = sphi 0, %s179
    %s180 = sphi 0, %s177
    %s181 = sphi 0, %s180
    %s197 = sphi 0, %s181
  $region4: #{context_voted_forward.2} parent=0 // loop_header_branch
    %16 = sbr.rel (%p14) target = $region8
  $region5: #{context_voted_forward.2} parent=0 // loop_body
    %s18 = ssub.s32 %s13, 1
    %s19 = ssub.s32 %s13, 2
    %s26 = sadd.s32 1, %s21
    %p27 = scmp.ge.s32.totalorder %s26, 2
    %s28 = scalar_select %p27, 0, %s26
    %s29 = sadd.s32 1, %s20
    %s30 = scalar_select %p27, %s29, %s20
    %p31 = scmp.ge.s32.totalorder %s30, 2
    %s32 = scalar_select %p31, 0, %s30
    %s33 = ssub.s32 %s20, %s32
    %s34 = ssub.s32 %s21, %s28
    %s35 = sor.u32 %s33, %s34
    %p36 = scmp.eq.s32.totalorder %s35, 0
    %s38 = sadd.s32 %s37, 1
    %s39 = scalar_select %p36, %s37, %s38
    %p42 = pneg %p36
    %p43 = scmp.eq.s32.totalorder %s13, 3
    %p44 = por %p42, %p43
    %p45 = scmp.ne.s32.totalorder %s37, %s40
    %p46 = scmp.eq.s32.totalorder %s13, 0
    %p47 = por %p45, %p46
    %p48 = scmp.ne.s32.totalorder %s37, %s40
    %p49 = scmp.eq.s32.totalorder %s18, 3
    %p50 = por %p48, %p49
    %p51 = scmp.ne.s32.totalorder %s40, %s41
    %p52 = scmp.eq.s32.totalorder %s18, 0
    %p53 = por %p51, %p52
    %p54 = scmp.ne.s32.totalorder %s40, %s41
    %p55 = scmp.eq.s32.totalorder %s19, 3
    %p56 = por %p54, %p55
    %p58 = scmp.ne.s32.totalorder %s41, %s57
    %p59 = scmp.eq.s32.totalorder %s19, 0
    %p60 = por %p58, %p59
    %s62 = sadd.s32 %s61, 1
    %p65 = scmp.eq.s32.totalorder %s13, 3
    %p66 = scmp.ne.s32.totalorder %s61, %s63
    %p67 = scmp.eq.s32.totalorder %s13, 0
    %p68 = por %p66, %p67
    %p69 = scmp.ne.s32.totalorder %s61, %s63
    %p70 = scmp.eq.s32.totalorder %s18, 3
    %p71 = por %p69, %p70
    %p72 = scmp.ne.s32.totalorder %s63, %s64
    %p73 = scmp.eq.s32.totalorder %s18, 0
    %p74 = por %p72, %p73
    %p75 = scmp.ne.s32.totalorder %s63, %s64
    %p76 = scmp.eq.s32.totalorder %s19, 3
    %p77 = por %p75, %p76
    %p79 = scmp.ne.s32.totalorder %s64, %s78
    %p80 = scmp.eq.s32.totalorder %s19, 0
    %p81 = por %p79, %p80
    %s83 = sadd.s32 %s82, 1
    %p86 = scmp.eq.s32.totalorder %s13, 3
    %p87 = scmp.ne.s32.totalorder %s82, %s84
    %p88 = scmp.eq.s32.totalorder %s13, 0
    %p89 = por %p87, %p88
    %p90 = scmp.ne.s32.totalorder %s82, %s84
    %p91 = scmp.eq.s32.totalorder %s18, 3
    %p92 = por %p90, %p91
    %p93 = scmp.ne.s32.totalorder %s84, %s85
    %p94 = scmp.eq.s32.totalorder %s18, 0
    %p95 = por %p93, %p94
    %p96 = scmp.ne.s32.totalorder %s84, %s85
    %p97 = scmp.eq.s32.totalorder %s19, 3
    %p98 = por %p96, %p97
    %p100 = scmp.ne.s32.totalorder %s85, %s99
    %p101 = scmp.eq.s32.totalorder %s19, 0
    %p102 = por %p100, %p101
    %s104 = sadd.s32 %s103, 1
    %p107 = scmp.eq.s32.totalorder %s13, 3
    %p108 = scmp.ne.s32.totalorder %s103, %s105
    %p109 = scmp.eq.s32.totalorder %s13, 0
    %p110 = por %p108, %p109
    %p111 = scmp.ne.s32.totalorder %s103, %s105
    %p112 = scmp.eq.s32.totalorder %s18, 3
    %p113 = por %p111, %p112
    %p114 = scmp.ne.s32.totalorder %s105, %s106
    %p115 = scmp.eq.s32.totalorder %s18, 0
    %p116 = por %p114, %p115
    %p117 = scmp.ne.s32.totalorder %s105, %s106
    %p118 = scmp.eq.s32.totalorder %s19, 3
    %p119 = por %p117, %p118
    %p121 = scmp.ne.s32.totalorder %s106, %s120
    %p122 = scmp.eq.s32.totalorder %s19, 0
    %p123 = por %p121, %p122
    %s125 = sadd.s32 %s124, 1
    %p128 = scmp.eq.s32.totalorder %s13, 3
    %p129 = scmp.ne.s32.totalorder %s124, %s126
    %p130 = scmp.eq.s32.totalorder %s13, 0
    %p131 = por %p129, %p130
    %p132 = scmp.ne.s32.totalorder %s124, %s126
    %p133 = scmp.eq.s32.totalorder %s18, 3
    %p134 = por %p132, %p133
    %p135 = scmp.ne.s32.totalorder %s126, %s127
    %p136 = scmp.eq.s32.totalorder %s18, 0
    %p137 = por %p135, %p136
    %p138 = scmp.ne.s32.totalorder %s126, %s127
    %p139 = scmp.eq.s32.totalorder %s19, 3
    %p140 = por %p138, %p139
    %p142 = scmp.ne.s32.totalorder %s127, %s141
    %p143 = scmp.eq.s32.totalorder %s19, 0
    %p144 = por %p142, %p143
    %s145 = ssub.s32 %s20, %s32
    %s146 = ssub.s32 %s21, %s28
    %s147 = sor.u32 %s145, %s146
    %p148 = scmp.eq.s32.totalorder %s147, 0
    %s150 = sadd.s32 %s149, 1
    %s151 = scalar_select %p148, %s149, %s150
    %p154 = pneg %p148
    %p155 = scmp.eq.s32.totalorder %s13, 3
    %p156 = por %p154, %p155
    %p157 = scmp.ne.s32.totalorder %s149, %s152
    %p158 = scmp.eq.s32.totalorder %s13, 0
    %p159 = por %p157, %p158
    %p160 = scmp.ne.s32.totalorder %s149, %s152
    %p161 = scmp.eq.s32.totalorder %s18, 3
    %p162 = por %p160, %p161
    %p163 = scmp.ne.s32.totalorder %s152, %s153
    %p164 = scmp.eq.s32.totalorder %s18, 0
    %p165 = por %p163, %p164
    %p166 = scmp.ne.s32.totalorder %s152, %s153
    %p167 = scmp.eq.s32.totalorder %s19, 3
    %p168 = por %p166, %p167
    %p170 = scmp.ne.s32.totalorder %s153, %s169
    %p171 = scmp.eq.s32.totalorder %s19, 0
    %p172 = por %p170, %p171
    %s173 = ssub.s32 %s20, %s32
    %s174 = ssub.s32 %s21, %s28
    %s175 = sor.u32 %s173, %s174
    %p176 = scmp.eq.s32.totalorder %s175, 0
    %s178 = sadd.s32 %s177, 1
    %s179 = scalar_select %p176, %s177, %s178
    %p182 = pneg %p176
    %p183 = scmp.eq.s32.totalorder %s13, 3
    %p184 = por %p182, %p183
    %p185 = scmp.ne.s32.totalorder %s177, %s180
    %p186 = scmp.eq.s32.totalorder %s13, 0
    %p187 = por %p185, %p186
    %p188 = scmp.ne.s32.totalorder %s177, %s180
    %p189 = scmp.eq.s32.totalorder %s18, 3
    %p190 = por %p188, %p189
    %p191 = scmp.ne.s32.totalorder %s180, %s181
    %p192 = scmp.eq.s32.totalorder %s18, 0
    %p193 = por %p191, %p192
    %p194 = scmp.ne.s32.totalorder %s180, %s181
    %p195 = scmp.eq.s32.totalorder %s19, 3
    %p196 = por %p194, %p195
    %p198 = scmp.ne.s32.totalorder %s181, %s197
    %p199 = scmp.eq.s32.totalorder %s19, 0
    %p200 = por %p198, %p199
    %p201 = scmp.le.s32.totalorder 1, %s13
    %p202 = scmp.lt.s32.totalorder %s13, 5
    %p203 = pnand %p201, %p202
    %p204 = pneg %p203
    // Predicated region
    $region9: #{context_voted_forward.2} parent=5 // pred_check
      _
    $region10: #{context_voted_forward.2} parent=5 // pred_check_branch
      %206 = sbr.rel (%p203) target = $region12
    $region11: #{context_voted_forward.2} parent=5 // pred_region
      %s207 = ssub.s32 %s13, 1
      // Predicated region
      $region13: #{context_voted_forward.2} parent=11 // pred_check
        %p208 = pneg %p74
      $region14: #{context_voted_forward.2} parent=11 // pred_check_branch
        %210 = sbr.rel (%p208) target = $region16
      $region15: #{context_voted_forward.2} parent=11 // pred_region
        _
      $region16: #{context_voted_forward.2} parent=11 // pred_fallthru
        _
      // Predicated region
      $region17: #{context_voted_forward.2} parent=11 // pred_check
        %p211 = pneg %p95
      $region18: #{context_voted_forward.2} parent=11 // pred_check_branch
        %213 = sbr.rel (%p211) target = $region20
      $region19: #{context_voted_forward.2} parent=11 // pred_region
        _
      $region20: #{context_voted_forward.2} parent=11 // pred_fallthru
        _
      // Predicated region
      $region21: #{context_voted_forward.2} parent=11 // pred_check
        %p214 = pneg %p116
      $region22: #{context_voted_forward.2} parent=11 // pred_check_branch
        %216 = sbr.rel (%p214) target = $region24
      $region23: #{context_voted_forward.2} parent=11 // pred_region
        _
      $region24: #{context_voted_forward.2} parent=11 // pred_fallthru
        _
      // Predicated region
      $region25: #{context_voted_forward.2} parent=11 // pred_check
        %p217 = pneg %p137
      $region26: #{context_voted_forward.2} parent=11 // pred_check_branch
        %219 = sbr.rel (%p217) target = $region28
      $region27: #{context_voted_forward.2} parent=11 // pred_region
        _
      $region28: #{context_voted_forward.2} parent=11 // pred_fallthru
        _
    $region12: #{context_voted_forward.2} parent=5 // pred_fallthru
      _
    %p220 = scmp.lt.s32.totalorder %s13, 4
    // Predicated region
    $region29: #{context_voted_forward.2} parent=5 // pred_check
      %p221 = pneg %p220
    $region30: #{context_voted_forward.2} parent=5 // pred_check_branch
      %223 = sbr.rel (%p221) target = $region32
    $region31: #{context_voted_forward.2} parent=5 // pred_region
      // Predicated region
      $region33: #{context_voted_forward.2} parent=31 // pred_check
        %p224 = pneg %p47
      $region34: #{context_voted_forward.2} parent=31 // pred_check_branch
        %226 = sbr.rel (%p224) target = $region36
      $region35: #{context_voted_forward.2} parent=31 // pred_region
        %s227 = smul.u32 16, %s21
        %p228 = scmp.lt.s32.totalorder %s20, 1
        %s229 = scalar_select %p228, %s20, 1
        %p230 = scmp.lt.s32.totalorder %s227, 31
        %s231 = scalar_select %p230, %s227, 31
        %s232 = smul.addr %s229, 32
        %s233 = sadd.s32 %s231, %s232
        %s234 = smul.addr %s233, 8
        %s235 = scalar_lea.vmem %s0, %s234
        %s236 = smul.u32 16, %s21
      $region36: #{context_voted_forward.2} parent=31 // pred_fallthru
        _
    $region32: #{context_voted_forward.2} parent=5 // pred_fallthru
      _
    %p237 = scmp.le.s32.totalorder 1, %s13
    %p238 = scmp.lt.s32.totalorder %s13, 5
    %p239 = pnand %p237, %p238
    %p240 = pneg %p239
    // Predicated region
    $region37: #{context_voted_forward.2} parent=5 // pred_check
      _
    $region38: #{context_voted_forward.2} parent=5 // pred_check_branch
      %242 = sbr.rel (%p239) target = $region40
    $region39: #{context_voted_forward.2} parent=5 // pred_region
      %s243 = ssub.s32 %s13, 1
      %s244 = smul.u32 16, %s23
      %p245 = scmp.lt.s32.totalorder %s22, 1
      %s246 = scalar_select %p245, %s22, 1
      %p247 = scmp.lt.s32.totalorder %s244, 31
      %s248 = scalar_select %p247, %s244, 31
      %s249 = smul.addr %s246, 32
      %s250 = sadd.s32 %s248, %s249
      %s251 = smul.addr %s250, 8
      %s252 = scalar_lea.vmem %s0, %s251
      %p253 = pneg %p53
      %p254 = pneg %p50
      %p255 = pneg %p74
      %p256 = pneg %p71
      %p257 = pneg %p95
      %p258 = pneg %p92
      %p259 = pneg %p116
      %p260 = pneg %p113
      %p261 = pneg %p137
      %p262 = pneg %p134
      %p263 = pneg %p165
      %p264 = pneg %p162
      %s265 = smul.u32 2, %s23
      %p266 = scmp.lt.s32.totalorder %s22, 1
      %s267 = scalar_select %p266, %s22, 1
      %p268 = scmp.lt.s32.totalorder %s265, 3
      %s269 = scalar_select %p268, %s265, 3
      %s270 = smul.addr %s267, 4
      %s271 = sadd.s32 %s269, %s270
      %s272 = smul.addr %s271, 8
      %s273 = scalar_lea.vmem %s5, %s272
      %p274 = pneg %p193
      %p275 = pneg %p190
      %s276 = smul.u32 2, %s23
      %p277 = scmp.lt.s32.totalorder %s22, 1
      %s278 = scalar_select %p277, %s22, 1
      %p279 = scmp.lt.s32.totalorder %s276, 3
      %s280 = scalar_select %p279, %s276, 3
      %s281 = smul.addr %s278, 4
      %s282 = sadd.s32 %s280, %s281
      %s283 = smul.addr %s282, 8
      %s284 = scalar_lea.vmem %s6, %s283
      %s285 = smul.u32 16, %s23
      %p286 = scmp.lt.s32.totalorder %s22, 1
      %s287 = scalar_select %p286, %s22, 1
      %p288 = scmp.lt.s32.totalorder %s285, 31
      %s289 = scalar_select %p288, %s285, 31
      %s290 = smul.addr %s287, 32
      %s291 = sadd.s32 %s289, %s290
      %s292 = smul.addr %s291, 8
      %s293 = scalar_lea.vmem %s0, %s292
      %s294 = smul.u32 16, %s23
      %s295 = smul.u32 2, %s23
      %p296 = scmp.lt.s32.totalorder %s22, 1
      %s297 = scalar_select %p296, %s22, 1
      %p298 = scmp.lt.s32.totalorder %s295, 3
      %s299 = scalar_select %p298, %s295, 3
      %s300 = smul.addr %s297, 4
      %s301 = sadd.s32 %s299, %s300
      %s302 = smul.addr %s301, 8
      %s303 = scalar_lea.vmem %s5, %s302
      %s304 = smul.u32 2, %s23
      %s305 = smul.u32 2, %s23
      %p306 = scmp.lt.s32.totalorder %s22, 1
      %s307 = scalar_select %p306, %s22, 1
      %p308 = scmp.lt.s32.totalorder %s305, 3
      %s309 = scalar_select %p308, %s305, 3
      %s310 = smul.addr %s307, 4
      %s311 = sadd.s32 %s309, %s310
      %s312 = smul.addr %s311, 8
      %s313 = scalar_lea.vmem %s6, %s312
      %s314 = smul.u32 2, %s23
      %v315 = vld [vmem:[%s293] sm:$0xff]
      %v316 = vld [vmem:[%s293 + $0x8] sm:$0xff]
      %v317 = vld [vmem:[%s293 + $0x10] sm:$0xff]
      %v318 = vld [vmem:[%s293 + $0x18] sm:$0xff]
      %v319 = vld [vmem:[%s293 + $0x20] sm:$0xff]
      %v320 = vld [vmem:[%s293 + $0x28] sm:$0xff]
      %v321 = vld [vmem:[%s293 + $0x30] sm:$0xff]
      %v322 = vld [vmem:[%s293 + $0x38] sm:$0xff]
      %v323 = vld [vmem:[%s293 + $0x40] sm:$0xff]
      %v324 = vld [vmem:[%s293 + $0x48] sm:$0xff]
      %v325 = vld [vmem:[%s293 + $0x50] sm:$0xff]
      %v326 = vld [vmem:[%s293 + $0x58] sm:$0xff]
      %v327 = vld [vmem:[%s293 + $0x60] sm:$0xff]
      %v328 = vld [vmem:[%s293 + $0x68] sm:$0xff]
      %v329 = vld [vmem:[%s293 + $0x70] sm:$0xff]
      %v330 = vld [vmem:[%s293 + $0x78] sm:$0xff]
      %v331 = vld [vmem:[%s1] sm:$0xff]
      %v332 = vld [vmem:[%s1 + $0x8] sm:$0xff]
      %v333 = vld [vmem:[%s1 + $0x10] sm:$0xff]
      %v334 = vld [vmem:[%s1 + $0x18] sm:$0xff]
      %v335 = vld [vmem:[%s1 + $0x20] sm:$0xff]
      %v336 = vld [vmem:[%s1 + $0x28] sm:$0xff]
      %v337 = vld [vmem:[%s1 + $0x30] sm:$0xff]
      %v338 = vld [vmem:[%s1 + $0x38] sm:$0xff]
      %v339 = vld [vmem:[%s1 + $0x40] sm:$0xff]
      %v340 = vld [vmem:[%s1 + $0x48] sm:$0xff]
      %v341 = vld [vmem:[%s1 + $0x50] sm:$0xff]
      %v342 = vld [vmem:[%s1 + $0x58] sm:$0xff]
      %v343 = vld [vmem:[%s1 + $0x60] sm:$0xff]
      %v344 = vld [vmem:[%s1 + $0x68] sm:$0xff]
      %v345 = vld [vmem:[%s1 + $0x70] sm:$0xff]
      %v346 = vld [vmem:[%s1 + $0x78] sm:$0xff]
      %v347 = vld [vmem:[%s2] sm:$0x1]
      %v349 = vlaneseq
      %v350 = vshrl.u32 %v349, 7
      %v351 = vsub.s32 0, %v350
      %v352 = vrot.slane %v347, %v351
      %354 = vmatprep.subr.mxu0 0.0
      %355 = vmatpush1.msra.mxu0 %v346
      %356 = vmatprep.subr.mxu0 0.0
      %357 = vmatpush1.msra.mxu0 %v345
      %358 = vmatprep.subr.mxu0 0.0
      %359 = vmatpush1.msra.mxu0 %v344
      %360 = vmatprep.subr.mxu0 0.0
      %361 = vmatpush1.msra.mxu0 %v343
      %362 = vmatprep.subr.mxu0 0.0
      %363 = vmatpush1.msra.mxu0 %v342
      %364 = vmatprep.subr.mxu0 0.0
      %365 = vmatpush1.msra.mxu0 %v341
      %366 = vmatprep.subr.mxu0 0.0
      %367 = vmatpush1.msra.mxu0 %v340
      %368 = vmatprep.subr.mxu0 0.0
      %369 = vmatpush1.msra.mxu0 %v339
      %370 = vmatprep.subr.mxu0 0.0
      %371 = vmatpush1.msra.mxu0 %v338
      %372 = vmatprep.subr.mxu0 0.0
      %373 = vmatpush1.msra.mxu0 %v337
      %374 = vmatprep.subr.mxu0 0.0
      %375 = vmatpush1.msra.mxu0 %v336
      %376 = vmatprep.subr.mxu0 0.0
      %377 = vmatpush1.msra.mxu0 %v335
      %378 = vmatprep.subr.mxu0 0.0
      %379 = vmatpush1.msra.mxu0 %v334
      %380 = vmatprep.subr.mxu0 0.0
      %381 = vmatpush1.msra.mxu0 %v333
      %382 = vmatprep.subr.mxu0 0.0
      %383 = vmatpush1.msra.mxu0 %v332
      %384 = vmatprep.subr.mxu0 0.0
      %385 = vmatpush1.msra.mxu0 %v331
      %386 = vmatprep.subr.mxu0 0.0
      %387 = vmatpush2.msra.mxu0 0.0
      %388 = vmatprep.subr.mxu0 0.0
      %389 = vmatpush2.msra.mxu0 0.0
      %390 = vmatprep.subr.mxu0 0.0
      %391 = vmatpush2.msra.mxu0 0.0
      %392 = vmatprep.subr.mxu0 0.0
      %393 = vmatpush2.msra.mxu0 0.0
      %394 = vmatprep.subr.mxu0 0.0
      %395 = vmatpush2.msra.mxu0 0.0
      %396 = vmatprep.subr.mxu0 0.0
      %397 = vmatpush2.msra.mxu0 0.0
      %398 = vmatprep.subr.mxu0 0.0
      %399 = vmatpush2.msra.mxu0 0.0
      %400 = vmatprep.subr.mxu0 0.0
      %401 = vmatpush2.msra.mxu0 0.0
      %402 = vmatprep.subr.mxu0 0.0
      %403 = vmatpush2.msra.mxu0 0.0
      %404 = vmatprep.subr.mxu0 0.0
      %405 = vmatpush2.msra.mxu0 0.0
      %406 = vmatprep.subr.mxu0 0.0
      %407 = vmatpush2.msra.mxu0 0.0
      %408 = vmatprep.subr.mxu0 0.0
      %409 = vmatpush2.msra.mxu0 0.0
      %410 = vmatprep.subr.mxu0 0.0
      %411 = vmatpush2.msra.mxu0 0.0
      %412 = vmatprep.subr.mxu0 0.0
      %413 = vmatpush2.msra.mxu0 0.0
      %414 = vmatprep.subr.mxu0 0.0
      %415 = vmatpush2.msra.mxu0 0.0
      %416 = vmatprep.subr.mxu0 0.0
      %417 = vmatpush2.msra.mxu0 0.0
      %418 = vmatprep.mubr.f32.mxu0 0.0
      %419 = vmatmul.mubr.f32.gmra.mxu0 %v315
      %v420 = vpop.f32.mrf.mxu0
      %v421 = vadd.f32 %v352, %v420
      %v422 = vpop.f32.mrf.mxu0
      %423 = vmatprep.mubr.f32.mxu0 0.0
      %424 = vmatmul.mubr.f32.gmra.mxu0 %v316
      %v425 = vpop.f32.mrf.mxu0
      %v426 = vadd.f32 %v352, %v425
      %v427 = vpop.f32.mrf.mxu0
      %428 = vmatprep.mubr.f32.mxu0 0.0
      %429 = vmatmul.mubr.f32.gmra.mxu0 %v317
      %v430 = vpop.f32.mrf.mxu0
      %v431 = vadd.f32 %v352, %v430
      %v432 = vpop.f32.mrf.mxu0
      %433 = vmatprep.mubr.f32.mxu0 0.0
      %434 = vmatmul.mubr.f32.gmra.mxu0 %v318
      %v435 = vpop.f32.mrf.mxu0
      %v436 = vadd.f32 %v352, %v435
      %v437 = vpop.f32.mrf.mxu0
      %438 = vmatprep.mubr.f32.mxu0 0.0
      %439 = vmatmul.mubr.f32.gmra.mxu0 %v319
      %v440 = vpop.f32.mrf.mxu0
      %v441 = vadd.f32 %v352, %v440
      %v442 = vpop.f32.mrf.mxu0
      %443 = vmatprep.mubr.f32.mxu0 0.0
      %444 = vmatmul.mubr.f32.gmra.mxu0 %v320
      %v445 = vpop.f32.mrf.mxu0
      %v446 = vadd.f32 %v352, %v445
      %v447 = vpop.f32.mrf.mxu0
      %448 = vmatprep.mubr.f32.mxu0 0.0
      %449 = vmatmul.mubr.f32.gmra.mxu0 %v321
      %v450 = vpop.f32.mrf.mxu0
      %v451 = vadd.f32 %v352, %v450
      %v452 = vpop.f32.mrf.mxu0
      %453 = vmatprep.mubr.f32.mxu0 0.0
      %454 = vmatmul.mubr.f32.gmra.mxu0 %v322
      %v455 = vpop.f32.mrf.mxu0
      %v456 = vadd.f32 %v352, %v455
      %v457 = vpop.f32.mrf.mxu0
      %458 = vmatprep.mubr.f32.mxu0 0.0
      %459 = vmatmul.mubr.f32.gmra.mxu0 %v323
      %v460 = vpop.f32.mrf.mxu0
      %v461 = vadd.f32 %v352, %v460
      %v462 = vpop.f32.mrf.mxu0
      %463 = vmatprep.mubr.f32.mxu0 0.0
      %464 = vmatmul.mubr.f32.gmra.mxu0 %v324
      %v465 = vpop.f32.mrf.mxu0
      %v466 = vadd.f32 %v352, %v465
      %v467 = vpop.f32.mrf.mxu0
      %468 = vmatprep.mubr.f32.mxu0 0.0
      %469 = vmatmul.mubr.f32.gmra.mxu0 %v325
      %v470 = vpop.f32.mrf.mxu0
      %v471 = vadd.f32 %v352, %v470
      %v472 = vpop.f32.mrf.mxu0
      %473 = vmatprep.mubr.f32.mxu0 0.0
      %474 = vmatmul.mubr.f32.gmra.mxu0 %v326
      %v475 = vpop.f32.mrf.mxu0
      %v476 = vadd.f32 %v352, %v475
      %v477 = vpop.f32.mrf.mxu0
      %478 = vmatprep.mubr.f32.mxu0 0.0
      %479 = vmatmul.mubr.f32.gmra.mxu0 %v327
      %v480 = vpop.f32.mrf.mxu0
      %v481 = vadd.f32 %v352, %v480
      %v482 = vpop.f32.mrf.mxu0
      %483 = vmatprep.mubr.f32.mxu0 0.0
      %484 = vmatmul.mubr.f32.gmra.mxu0 %v328
      %v485 = vpop.f32.mrf.mxu0
      %v486 = vadd.f32 %v352, %v485
      %v487 = vpop.f32.mrf.mxu0
      %488 = vmatprep.mubr.f32.mxu0 0.0
      %489 = vmatmul.mubr.f32.gmra.mxu0 %v329
      %v490 = vpop.f32.mrf.mxu0
      %v491 = vadd.f32 %v352, %v490
      %v492 = vpop.f32.mrf.mxu0
      %493 = vmatprep.mubr.f32.mxu0 0.0
      %494 = vmatmul.mubr.f32.gmra.mxu0 %v330
      %v495 = vpop.f32.mrf.mxu0
      %v496 = vadd.f32 %v352, %v495
      %v497 = vpop.f32.mrf.mxu0
      %498 = vdwg.mxu0
      %v499 = vld [vmem:[%s3] sm:$0xff]
      %v500 = vld [vmem:[%s3 + $0x8] sm:$0xff]
      %v501 = vld [vmem:[%s3 + $0x10] sm:$0xff]
      %v502 = vld [vmem:[%s3 + $0x18] sm:$0xff]
      %v503 = vld [vmem:[%s3 + $0x20] sm:$0xff]
      %v504 = vld [vmem:[%s3 + $0x28] sm:$0xff]
      %v505 = vld [vmem:[%s3 + $0x30] sm:$0xff]
      %v506 = vld [vmem:[%s3 + $0x38] sm:$0xff]
      %v507 = vld [vmem:[%s3 + $0x40] sm:$0xff]
      %v508 = vld [vmem:[%s3 + $0x48] sm:$0xff]
      %v509 = vld [vmem:[%s3 + $0x50] sm:$0xff]
      %v510 = vld [vmem:[%s3 + $0x58] sm:$0xff]
      %v511 = vld [vmem:[%s3 + $0x60] sm:$0xff]
      %v512 = vld [vmem:[%s3 + $0x68] sm:$0xff]
      %v513 = vld [vmem:[%s3 + $0x70] sm:$0xff]
      %v514 = vld [vmem:[%s3 + $0x78] sm:$0xff]
      %v515 = vld [vmem:[%s4] sm:$0x1]
      %v517 = vlaneseq
      %v518 = vshrl.u32 %v517, 7
      %v519 = vsub.s32 0, %v518
      %v520 = vrot.slane %v515, %v519
      %522 = vmatprep.subr.mxu0 0.0
      %523 = vmatpush1.msra.mxu0 %v514
      %524 = vmatprep.subr.mxu0 0.0
      %525 = vmatpush1.msra.mxu0 %v513
      %526 = vmatprep.subr.mxu0 0.0
      %527 = vmatpush1.msra.mxu0 %v512
      %528 = vmatprep.subr.mxu0 0.0
      %529 = vmatpush1.msra.mxu0 %v511
      %530 = vmatprep.subr.mxu0 0.0
      %531 = vmatpush1.msra.mxu0 %v510
      %532 = vmatprep.subr.mxu0 0.0
      %533 = vmatpush1.msra.mxu0 %v509
      %534 = vmatprep.subr.mxu0 0.0
      %535 = vmatpush1.msra.mxu0 %v508
      %536 = vmatprep.subr.mxu0 0.0
      %537 = vmatpush1.msra.mxu0 %v507
      %538 = vmatprep.subr.mxu0 0.0
      %539 = vmatpush1.msra.mxu0 %v506
      %540 = vmatprep.subr.mxu0 0.0
      %541 = vmatpush1.msra.mxu0 %v505
      %542 = vmatprep.subr.mxu0 0.0
      %543 = vmatpush1.msra.mxu0 %v504
      %544 = vmatprep.subr.mxu0 0.0
      %545 = vmatpush1.msra.mxu0 %v503
      %546 = vmatprep.subr.mxu0 0.0
      %547 = vmatpush1.msra.mxu0 %v502
      %548 = vmatprep.subr.mxu0 0.0
      %549 = vmatpush1.msra.mxu0 %v501
      %550 = vmatprep.subr.mxu0 0.0
      %551 = vmatpush1.msra.mxu0 %v500
      %552 = vmatprep.subr.mxu0 0.0
      %553 = vmatpush1.msra.mxu0 %v499
      %554 = vmatprep.subr.mxu0 0.0
      %555 = vmatpush2.msra.mxu0 0.0
      %556 = vmatprep.subr.mxu0 0.0
      %557 = vmatpush2.msra.mxu0 0.0
      %558 = vmatprep.subr.mxu0 0.0
      %559 = vmatpush2.msra.mxu0 0.0
      %560 = vmatprep.subr.mxu0 0.0
      %561 = vmatpush2.msra.mxu0 0.0
      %562 = vmatprep.subr.mxu0 0.0
      %563 = vmatpush2.msra.mxu0 0.0
      %564 = vmatprep.subr.mxu0 0.0
      %565 = vmatpush2.msra.mxu0 0.0
      %566 = vmatprep.subr.mxu0 0.0
      %567 = vmatpush2.msra.mxu0 0.0
      %568 = vmatprep.subr.mxu0 0.0
      %569 = vmatpush2.msra.mxu0 0.0
      %570 = vmatprep.subr.mxu0 0.0
      %571 = vmatpush2.msra.mxu0 0.0
      %572 = vmatprep.subr.mxu0 0.0
      %573 = vmatpush2.msra.mxu0 0.0
      %574 = vmatprep.subr.mxu0 0.0
      %575 = vmatpush2.msra.mxu0 0.0
      %576 = vmatprep.subr.mxu0 0.0
      %577 = vmatpush2.msra.mxu0 0.0
      %578 = vmatprep.subr.mxu0 0.0
      %579 = vmatpush2.msra.mxu0 0.0
      %580 = vmatprep.subr.mxu0 0.0
      %581 = vmatpush2.msra.mxu0 0.0
      %582 = vmatprep.subr.mxu0 0.0
      %583 = vmatpush2.msra.mxu0 0.0
      %584 = vmatprep.subr.mxu0 0.0
      %585 = vmatpush2.msra.mxu0 0.0
      %586 = vmatprep.mubr.f32.mxu0 0.0
      %587 = vmatmul.mubr.f32.gmra.mxu0 %v315
      %v588 = vpop.f32.mrf.mxu0
      %v589 = vadd.f32 %v520, %v588
      %v590 = vpop.f32.mrf.mxu0
      %591 = vmatprep.mubr.f32.mxu0 0.0
      %592 = vmatmul.mubr.f32.gmra.mxu0 %v316
      %v593 = vpop.f32.mrf.mxu0
      %v594 = vadd.f32 %v520, %v593
      %v595 = vpop.f32.mrf.mxu0
      %596 = vmatprep.mubr.f32.mxu0 0.0
      %597 = vmatmul.mubr.f32.gmra.mxu0 %v317
      %v598 = vpop.f32.mrf.mxu0
      %v599 = vadd.f32 %v520, %v598
      %v600 = vpop.f32.mrf.mxu0
      %601 = vmatprep.mubr.f32.mxu0 0.0
      %602 = vmatmul.mubr.f32.gmra.mxu0 %v318
      %v603 = vpop.f32.mrf.mxu0
      %v604 = vadd.f32 %v520, %v603
      %v605 = vpop.f32.mrf.mxu0
      %606 = vmatprep.mubr.f32.mxu0 0.0
      %607 = vmatmul.mubr.f32.gmra.mxu0 %v319
      %v608 = vpop.f32.mrf.mxu0
      %v609 = vadd.f32 %v520, %v608
      %v610 = vpop.f32.mrf.mxu0
      %611 = vmatprep.mubr.f32.mxu0 0.0
      %612 = vmatmul.mubr.f32.gmra.mxu0 %v320
      %v613 = vpop.f32.mrf.mxu0
      %v614 = vadd.f32 %v520, %v613
      %v615 = vpop.f32.mrf.mxu0
      %616 = vmatprep.mubr.f32.mxu0 0.0
      %617 = vmatmul.mubr.f32.gmra.mxu0 %v321
      %v618 = vpop.f32.mrf.mxu0
      %v619 = vadd.f32 %v520, %v618
      %v620 = vpop.f32.mrf.mxu0
      %621 = vmatprep.mubr.f32.mxu0 0.0
      %622 = vmatmul.mubr.f32.gmra.mxu0 %v322
      %v623 = vpop.f32.mrf.mxu0
      %v624 = vadd.f32 %v520, %v623
      %v625 = vpop.f32.mrf.mxu0
      %626 = vmatprep.mubr.f32.mxu0 0.0
      %627 = vmatmul.mubr.f32.gmra.mxu0 %v323
      %v628 = vpop.f32.mrf.mxu0
      %v629 = vadd.f32 %v520, %v628
      %v630 = vpop.f32.mrf.mxu0
      %631 = vmatprep.mubr.f32.mxu0 0.0
      %632 = vmatmul.mubr.f32.gmra.mxu0 %v324
      %v633 = vpop.f32.mrf.mxu0
      %v634 = vadd.f32 %v520, %v633
      %v635 = vpop.f32.mrf.mxu0
      %636 = vmatprep.mubr.f32.mxu0 0.0
      %637 = vmatmul.mubr.f32.gmra.mxu0 %v325
      %v638 = vpop.f32.mrf.mxu0
      %v639 = vadd.f32 %v520, %v638
      %v640 = vpop.f32.mrf.mxu0
      %641 = vmatprep.mubr.f32.mxu0 0.0
      %642 = vmatmul.mubr.f32.gmra.mxu0 %v326
      %v643 = vpop.f32.mrf.mxu0
      %v644 = vadd.f32 %v520, %v643
      %v645 = vpop.f32.mrf.mxu0
      %646 = vmatprep.mubr.f32.mxu0 0.0
      %647 = vmatmul.mubr.f32.gmra.mxu0 %v327
      %v648 = vpop.f32.mrf.mxu0
      %v649 = vadd.f32 %v520, %v648
      %v650 = vpop.f32.mrf.mxu0
      %651 = vmatprep.mubr.f32.mxu0 0.0
      %652 = vmatmul.mubr.f32.gmra.mxu0 %v328
      %v653 = vpop.f32.mrf.mxu0
      %v654 = vadd.f32 %v520, %v653
      %v655 = vpop.f32.mrf.mxu0
      %656 = vmatprep.mubr.f32.mxu0 0.0
      %657 = vmatmul.mubr.f32.gmra.mxu0 %v329
      %v658 = vpop.f32.mrf.mxu0
      %v659 = vadd.f32 %v520, %v658
      %v660 = vpop.f32.mrf.mxu0
      %661 = vmatprep.mubr.f32.mxu0 0.0
      %662 = vmatmul.mubr.f32.gmra.mxu0 %v330
      %v663 = vpop.f32.mrf.mxu0
      %v664 = vadd.f32 %v520, %v663
      %v665 = vpop.f32.mrf.mxu0
      %666 = vdwg.mxu0
      %vm667 = vcmask 523264
      %v668 = vsel %vm667, %v421, -inf
      %v669 = vrot.slane %v668, 4
      %v670 = vmax.f32 %v668, %v669
      %v671 = vrot.slane %v670, 2
      %v672 = vmax.f32 %v670, %v671
      %v673 = vrot.slane %v672, 1
      %v674 = vmax.f32 %v672, %v673
      %v675 = vsel %vm667, %v426, -inf
      %v676 = vrot.slane %v675, 4
      %v677 = vmax.f32 %v675, %v676
      %v678 = vrot.slane %v677, 2
      %v679 = vmax.f32 %v677, %v678
      %v680 = vrot.slane %v679, 1
      %v681 = vmax.f32 %v679, %v680
      %v682 = vsel %vm667, %v431, -inf
      %v683 = vrot.slane %v682, 4
      %v684 = vmax.f32 %v682, %v683
      %v685 = vrot.slane %v684, 2
      %v686 = vmax.f32 %v684, %v685
      %v687 = vrot.slane %v686, 1
      %v688 = vmax.f32 %v686, %v687
      %v689 = vsel %vm667, %v436, -inf
      %v690 = vrot.slane %v689, 4
      %v691 = vmax.f32 %v689, %v690
      %v692 = vrot.slane %v691, 2
      %v693 = vmax.f32 %v691, %v692
      %v694 = vrot.slane %v693, 1
      %v695 = vmax.f32 %v693, %v694
      %v696 = vsel %vm667, %v441, -inf
      %v697 = vrot.slane %v696, 4
      %v698 = vmax.f32 %v696, %v697
      %v699 = vrot.slane %v698, 2
      %v700 = vmax.f32 %v698, %v699
      %v701 = vrot.slane %v700, 1
      %v702 = vmax.f32 %v700, %v701
      %v703 = vsel %vm667, %v446, -inf
      %v704 = vrot.slane %v703, 4
      %v705 = vmax.f32 %v703, %v704
      %v706 = vrot.slane %v705, 2
      %v707 = vmax.f32 %v705, %v706
      %v708 = vrot.slane %v707, 1
      %v709 = vmax.f32 %v707, %v708
      %v710 = vsel %vm667, %v451, -inf
      %v711 = vrot.slane %v710, 4
      %v712 = vmax.f32 %v710, %v711
      %v713 = vrot.slane %v712, 2
      %v714 = vmax.f32 %v712, %v713
      %v715 = vrot.slane %v714, 1
      %v716 = vmax.f32 %v714, %v715
      %v717 = vsel %vm667, %v456, -inf
      %v718 = vrot.slane %v717, 4
      %v719 = vmax.f32 %v717, %v718
      %v720 = vrot.slane %v719, 2
      %v721 = vmax.f32 %v719, %v720
      %v722 = vrot.slane %v721, 1
      %v723 = vmax.f32 %v721, %v722
      %v724 = vsel %vm667, %v461, -inf
      %v725 = vrot.slane %v724, 4
      %v726 = vmax.f32 %v724, %v725
      %v727 = vrot.slane %v726, 2
      %v728 = vmax.f32 %v726, %v727
      %v729 = vrot.slane %v728, 1
      %v730 = vmax.f32 %v728, %v729
      %v731 = vsel %vm667, %v466, -inf
      %v732 = vrot.slane %v731, 4
      %v733 = vmax.f32 %v731, %v732
      %v734 = vrot.slane %v733, 2
      %v735 = vmax.f32 %v733, %v734
      %v736 = vrot.slane %v735, 1
      %v737 = vmax.f32 %v735, %v736
      %v738 = vsel %vm667, %v471, -inf
      %v739 = vrot.slane %v738, 4
      %v740 = vmax.f32 %v738, %v739
      %v741 = vrot.slane %v740, 2
      %v742 = vmax.f32 %v740, %v741
      %v743 = vrot.slane %v742, 1
      %v744 = vmax.f32 %v742, %v743
      %v745 = vsel %vm667, %v476, -inf
      %v746 = vrot.slane %v745, 4
      %v747 = vmax.f32 %v745, %v746
      %v748 = vrot.slane %v747, 2
      %v749 = vmax.f32 %v747, %v748
      %v750 = vrot.slane %v749, 1
      %v751 = vmax.f32 %v749, %v750
      %v752 = vsel %vm667, %v481, -inf
      %v753 = vrot.slane %v752, 4
      %v754 = vmax.f32 %v752, %v753
      %v755 = vrot.slane %v754, 2
      %v756 = vmax.f32 %v754, %v755
      %v757 = vrot.slane %v756, 1
      %v758 = vmax.f32 %v756, %v757
      %v759 = vsel %vm667, %v486, -inf
      %v760 = vrot.slane %v759, 4
      %v761 = vmax.f32 %v759, %v760
      %v762 = vrot.slane %v761, 2
      %v763 = vmax.f32 %v761, %v762
      %v764 = vrot.slane %v763, 1
      %v765 = vmax.f32 %v763, %v764
      %v766 = vsel %vm667, %v491, -inf
      %v767 = vrot.slane %v766, 4
      %v768 = vmax.f32 %v766, %v767
      %v769 = vrot.slane %v768, 2
      %v770 = vmax.f32 %v768, %v769
      %v771 = vrot.slane %v770, 1
      %v772 = vmax.f32 %v770, %v771
      %v773 = vsel %vm667, %v496, -inf
      %v774 = vrot.slane %v773, 4
      %v775 = vmax.f32 %v773, %v774
      %v776 = vrot.slane %v775, 2
      %v777 = vmax.f32 %v775, %v776
      %v778 = vrot.slane %v777, 1
      %v779 = vmax.f32 %v777, %v778
      %vm796 = vcmask 1041409
      %v797 = vsel %vm796, %v681, %v674
      %vm798 = vcmask 1042434
      %v799 = vsel %vm798, %v688, %v797
      %vm800 = vcmask 1043459
      %v801 = vsel %vm800, %v695, %v799
      %vm802 = vcmask 1044484
      %v803 = vsel %vm802, %v702, %v801
      %vm804 = vcmask 1045509
      %v805 = vsel %vm804, %v709, %v803
      %vm806 = vcmask 1046534
      %v807 = vsel %vm806, %v716, %v805
      %vm808 = vcmask 1047559
      %v809 = vsel %vm808, %v723, %v807
      %v810 = vsel %vm796, %v737, %v730
      %v811 = vsel %vm798, %v744, %v810
      %v812 = vsel %vm800, %v751, %v811
      %v813 = vsel %vm802, %v758, %v812
      %v814 = vsel %vm804, %v765, %v813
      %v815 = vsel %vm806, %v772, %v814
      %v816 = vsel %vm808, %v779, %v815
      %819 = vst.msk [vmem:[%s303] sm:$0xff] %vm667, %v809
      %820 = vst.msk [vmem:[%s303 + $0x8] sm:$0xff] %vm667, %v816
      %v821 = vsel %vm667, %v589, -inf
      %v822 = vrot.slane %v821, 4
      %v823 = vmax.f32 %v821, %v822
      %v824 = vrot.slane %v823, 2
      %v825 = vmax.f32 %v823, %v824
      %v826 = vrot.slane %v825, 1
      %v827 = vmax.f32 %v825, %v826
      %v828 = vsel %vm667, %v594, -inf
      %v829 = vrot.slane %v828, 4
      %v830 = vmax.f32 %v828, %v829
      %v831 = vrot.slane %v830, 2
      %v832 = vmax.f32 %v830, %v831
      %v833 = vrot.slane %v832, 1
      %v834 = vmax.f32 %v832, %v833
      %v835 = vsel %vm667, %v599, -inf
      %v836 = vrot.slane %v835, 4
      %v837 = vmax.f32 %v835, %v836
      %v838 = vrot.slane %v837, 2
      %v839 = vmax.f32 %v837, %v838
      %v840 = vrot.slane %v839, 1
      %v841 = vmax.f32 %v839, %v840
      %v842 = vsel %vm667, %v604, -inf
      %v843 = vrot.slane %v842, 4
      %v844 = vmax.f32 %v842, %v843
      %v845 = vrot.slane %v844, 2
      %v846 = vmax.f32 %v844, %v845
      %v847 = vrot.slane %v846, 1
      %v848 = vmax.f32 %v846, %v847
      %v849 = vsel %vm667, %v609, -inf
      %v850 = vrot.slane %v849, 4
      %v851 = vmax.f32 %v849, %v850
      %v852 = vrot.slane %v851, 2
      %v853 = vmax.f32 %v851, %v852
      %v854 = vrot.slane %v853, 1
      %v855 = vmax.f32 %v853, %v854
      %v856 = vsel %vm667, %v614, -inf
      %v857 = vrot.slane %v856, 4
      %v858 = vmax.f32 %v856, %v857
      %v859 = vrot.slane %v858, 2
      %v860 = vmax.f32 %v858, %v859
      %v861 = vrot.slane %v860, 1
      %v862 = vmax.f32 %v860, %v861
      %v863 = vsel %vm667, %v619, -inf
      %v864 = vrot.slane %v863, 4
      %v865 = vmax.f32 %v863, %v864
      %v866 = vrot.slane %v865, 2
      %v867 = vmax.f32 %v865, %v866
      %v868 = vrot.slane %v867, 1
      %v869 = vmax.f32 %v867, %v868
      %v870 = vsel %vm667, %v624, -inf
      %v871 = vrot.slane %v870, 4
      %v872 = vmax.f32 %v870, %v871
      %v873 = vrot.slane %v872, 2
      %v874 = vmax.f32 %v872, %v873
      %v875 = vrot.slane %v874, 1
      %v876 = vmax.f32 %v874, %v875
      %v877 = vsel %vm667, %v629, -inf
      %v878 = vrot.slane %v877, 4
      %v879 = vmax.f32 %v877, %v878
      %v880 = vrot.slane %v879, 2
      %v881 = vmax.f32 %v879, %v880
      %v882 = vrot.slane %v881, 1
      %v883 = vmax.f32 %v881, %v882
      %v884 = vsel %vm667, %v634, -inf
      %v885 = vrot.slane %v884, 4
      %v886 = vmax.f32 %v884, %v885
      %v887 = vrot.slane %v886, 2
      %v888 = vmax.f32 %v886, %v887
      %v889 = vrot.slane %v888, 1
      %v890 = vmax.f32 %v888, %v889
      %v891 = vsel %vm667, %v639, -inf
      %v892 = vrot.slane %v891, 4
      %v893 = vmax.f32 %v891, %v892
      %v894 = vrot.slane %v893, 2
      %v895 = vmax.f32 %v893, %v894
      %v896 = vrot.slane %v895, 1
      %v897 = vmax.f32 %v895, %v896
      %v898 = vsel %vm667, %v644, -inf
      %v899 = vrot.slane %v898, 4
      %v900 = vmax.f32 %v898, %v899
      %v901 = vrot.slane %v900, 2
      %v902 = vmax.f32 %v900, %v901
      %v903 = vrot.slane %v902, 1
      %v904 = vmax.f32 %v902, %v903
      %v905 = vsel %vm667, %v649, -inf
      %v906 = vrot.slane %v905, 4
      %v907 = vmax.f32 %v905, %v906
      %v908 = vrot.slane %v907, 2
      %v909 = vmax.f32 %v907, %v908
      %v910 = vrot.slane %v909, 1
      %v911 = vmax.f32 %v909, %v910
      %v912 = vsel %vm667, %v654, -inf
      %v913 = vrot.slane %v912, 4
      %v914 = vmax.f32 %v912, %v913
      %v915 = vrot.slane %v914, 2
      %v916 = vmax.f32 %v914, %v915
      %v917 = vrot.slane %v916, 1
      %v918 = vmax.f32 %v916, %v917
      %v919 = vsel %vm667, %v659, -inf
      %v920 = vrot.slane %v919, 4
      %v921 = vmax.f32 %v919, %v920
      %v922 = vrot.slane %v921, 2
      %v923 = vmax.f32 %v921, %v922
      %v924 = vrot.slane %v923, 1
      %v925 = vmax.f32 %v923, %v924
      %v926 = vsel %vm667, %v664, -inf
      %v927 = vrot.slane %v926, 4
      %v928 = vmax.f32 %v926, %v927
      %v929 = vrot.slane %v928, 2
      %v930 = vmax.f32 %v928, %v929
      %v931 = vrot.slane %v930, 1
      %v932 = vmax.f32 %v930, %v931
      %v949 = vsel %vm796, %v834, %v827
      %v950 = vsel %vm798, %v841, %v949
      %v951 = vsel %vm800, %v848, %v950
      %v952 = vsel %vm802, %v855, %v951
      %v953 = vsel %vm804, %v862, %v952
      %v954 = vsel %vm806, %v869, %v953
      %v955 = vsel %vm808, %v876, %v954
      %v956 = vsel %vm796, %v890, %v883
      %v957 = vsel %vm798, %v897, %v956
      %v958 = vsel %vm800, %v904, %v957
      %v959 = vsel %vm802, %v911, %v958
      %v960 = vsel %vm804, %v918, %v959
      %v961 = vsel %vm806, %v925, %v960
      %v962 = vsel %vm808, %v932, %v961
      %965 = vst.msk [vmem:[%s313] sm:$0xff] %vm667, %v955
      %966 = vst.msk [vmem:[%s313 + $0x8] sm:$0xff] %vm667, %v962
      %s967 = smul.u32 2, %s23
      %p968 = scmp.lt.s32.totalorder %s22, 1
      %s969 = scalar_select %p968, %s22, 1
      %p970 = scmp.lt.s32.totalorder %s967, 3
      %s971 = scalar_select %p970, %s967, 3
      %s972 = smul.addr %s969, 4
      %s973 = sadd.s32 %s971, %s972
      %s974 = smul.addr %s973, 8
      %s975 = scalar_lea.vmem %s5, %s974
      %s976 = smul.u32 2, %s23
      %p977 = scmp.lt.s32.totalorder %s22, 1
      %s978 = scalar_select %p977, %s22, 1
      %p979 = scmp.lt.s32.totalorder %s976, 3
      %s980 = scalar_select %p979, %s976, 3
      %s981 = smul.addr %s978, 4
      %s982 = sadd.s32 %s980, %s981
      %s983 = smul.addr %s982, 8
      %s984 = scalar_lea.vmem %s6, %s983
      // Predicated region
      $region41: #{context_voted_forward.2} parent=39 // pred_check
        %p985 = pneg %p162
      $region42: #{context_voted_forward.2} parent=39 // pred_check_branch
        %987 = sbr.rel (%p985) target = $region44
      $region43: #{context_voted_forward.2} parent=39 // pred_region
        %s988 = smul.u32 2, %s23
      $region44: #{context_voted_forward.2} parent=39 // pred_fallthru
        _
      // Predicated region
      $region45: #{context_voted_forward.2} parent=39 // pred_check
        %p989 = pneg %p190
      $region46: #{context_voted_forward.2} parent=39 // pred_check_branch
        %991 = sbr.rel (%p989) target = $region48
      $region47: #{context_voted_forward.2} parent=39 // pred_region
        %s992 = smul.u32 2, %s23
      $region48: #{context_voted_forward.2} parent=39 // pred_fallthru
        _
    $region40: #{context_voted_forward.2} parent=5 // pred_fallthru
      _
    %p993 = scmp.le.s32.totalorder 2, %s13
    // Predicated region
    $region49: #{context_voted_forward.2} parent=5 // pred_check
      %p994 = pneg %p993
    $region50: #{context_voted_forward.2} parent=5 // pred_check_branch
      %996 = sbr.rel (%p994) target = $region52
    $region51: #{context_voted_forward.2} parent=5 // pred_region
      %s997 = ssub.s32 %s13, 2
      // Predicated region
      $region53: #{context_voted_forward.2} parent=51 // pred_check
        %p998 = pneg %p168
      $region54: #{context_voted_forward.2} parent=51 // pred_check_branch
        %1000 = sbr.rel (%p998) target = $region56
      $region55: #{context_voted_forward.2} parent=51 // pred_region
        %s1001 = smul.u32 2, %s25
        %p1002 = scmp.lt.s32.totalorder %s24, 1
        %s1003 = scalar_select %p1002, %s24, 1
        %p1004 = scmp.lt.s32.totalorder %s1001, 3
        %s1005 = scalar_select %p1004, %s1001, 3
        %s1006 = smul.addr %s1003, 4
        %s1007 = sadd.s32 %s1005, %s1006
        %s1008 = smul.addr %s1007, 8
        %s1009 = scalar_lea.vmem %s5, %s1008
      $region56: #{context_voted_forward.2} parent=51 // pred_fallthru
        _
      // Predicated region
      $region57: #{context_voted_forward.2} parent=51 // pred_check
        %p1010 = pneg %p196
      $region58: #{context_voted_forward.2} parent=51 // pred_check_branch
        %1012 = sbr.rel (%p1010) target = $region60
      $region59: #{context_voted_forward.2} parent=51 // pred_region
        %s1013 = smul.u32 2, %s25
        %p1014 = scmp.lt.s32.totalorder %s24, 1
        %s1015 = scalar_select %p1014, %s24, 1
        %p1016 = scmp.lt.s32.totalorder %s1013, 3
        %s1017 = scalar_select %p1016, %s1013, 3
        %s1018 = smul.addr %s1015, 4
        %s1019 = sadd.s32 %s1017, %s1018
        %s1020 = smul.addr %s1019, 8
        %s1021 = scalar_lea.vmem %s6, %s1020
      $region60: #{context_voted_forward.2} parent=51 // pred_fallthru
        _
    $region52: #{context_voted_forward.2} parent=5 // pred_fallthru
      _
  $region6: #{context_voted_forward.2} parent=0 // loop_footer
    %s17 = sadd.s32 1, %s13
  $region7: #{context_voted_forward.2} parent=0 // loop_footer_branch
    %12 = sbr.rel target = $region3
  $region8: #{context_voted_forward.2} parent=0 // loop_exit
    _

// kernel: context_voted_forward.3
$region0: #{context_voted_forward.3}
  #allocation0 [shape = 'u32[]', space=smem, size = 0x4, offset = 0x4, fixed_abs, tag = 'smem constant byte address 0x4 - core index']
  #allocation1 [shape = 'u32[144,128]{1,0:T(1,128)}', space=vmem, size = 0x12000, scoped, tag = 'internal scratch']
  %s0 = inlined_call_operand.vmem [shape: f32[2,256,128], index: 0, kind: input, shape index: {}, may-alias: {0,9}]
  %s1 = inlined_call_operand.vmem [shape: f32[2,32,64], index: 1, kind: input, shape index: {}]
  %s2 = inlined_call_operand.vmem [shape: f32[2,32,64], index: 2, kind: input, shape index: {}]
  %s3 = inlined_call_operand.vmem [shape: f32[128,64], index: 3, kind: input, shape index: {}]
  %s4 = inlined_call_operand.vmem [shape: f32[1,64], index: 4, kind: input, shape index: {}]
  %s5 = inlined_call_operand.vmem [shape: f32[64,128], index: 5, kind: input, shape index: {}]
  %s6 = inlined_call_operand.vmem [shape: f32[1,128], index: 6, kind: input, shape index: {}]
  %s7 = inlined_call_operand.vmem [shape: f32[1,128], index: 7, kind: input, shape index: {}]
  %s8 = inlined_call_operand.vmem [shape: f32[1,128], index: 8, kind: input, shape index: {}]
  %s9 = inlined_call_operand.vmem [shape: f32[2,256,128], index: 9, kind: output, shape index: {}, may-alias: {0,9}]
  %s10 = sld [smem:[#allocation0]]
  $region69: #{context_voted_forward.3} parent=0
    _
  %s12 = ssub.s32 1, %s10
  %s13 = scalar_select 0, %s12, %s10
  loop: start=0, step=1, limit=6
  $region2: #{context_voted_forward.3} parent=0 // loop_pre_header
    _
  $region3: #{context_voted_forward.3} parent=0 // loop_header
    %s15 = sphi 0, %s19
    %p16 = scmp.ge.s32.totalorder %s15, 6
    %s22 = sphi 0, %s34
    %s23 = sphi 0, %s30
    %s24 = sphi 0, %s22
    %s25 = sphi 0, %s23
    %s26 = sphi 0, %s24
    %s27 = sphi 0, %s25
    %s39 = sphi 0, %s41
    %s42 = sphi 0, %s39
    %s43 = sphi 0, %s42
    %s59 = sphi 0, %s43
    %s65 = sphi 0, %s67
    %s68 = sphi 0, %s65
    %s69 = sphi 0, %s68
    %s85 = sphi 0, %s69
    %s91 = sphi 0, %s93
    %s94 = sphi 0, %s91
    %s95 = sphi 0, %s94
    %s111 = sphi 0, %s95
    %s115 = sphi 0, %s115
    %s117 = sphi 0, %s115
    %s118 = sphi 0, %s117
    %s132 = sphi 0, %s118
    %s136 = sphi 0, %s136
    %s138 = sphi 0, %s136
    %s139 = sphi 0, %s138
    %s153 = sphi 0, %s139
    %s157 = sphi 0, %s157
    %s159 = sphi 0, %s157
    %s160 = sphi 0, %s159
    %s174 = sphi 0, %s160
    %s178 = sphi 0, %s178
    %s180 = sphi 0, %s178
    %s181 = sphi 0, %s180
    %s195 = sphi 0, %s181
    %s199 = sphi 0, %s199
    %s201 = sphi 0, %s199
    %s202 = sphi 0, %s201
    %s216 = sphi 0, %s202
    %s220 = sphi 0, %s220
    %s222 = sphi 0, %s220
    %s223 = sphi 0, %s222
    %s237 = sphi 0, %s223
    %s245 = sphi 0, %s247
    %s248 = sphi 0, %s245
    %s249 = sphi 0, %s248
    %s265 = sphi 0, %s249
  $region4: #{context_voted_forward.3} parent=0 // loop_header_branch
    %18 = sbr.rel (%p16) target = $region8
  $region5: #{context_voted_forward.3} parent=0 // loop_body
    %s20 = ssub.s32 %s15, 1
    %s21 = ssub.s32 %s15, 2
    %s28 = sadd.s32 1, %s23
    %p29 = scmp.ge.s32.totalorder %s28, 2
    %s30 = scalar_select %p29, 0, %s28
    %s31 = sadd.s32 1, %s22
    %s32 = scalar_select %p29, %s31, %s22
    %p33 = scmp.ge.s32.totalorder %s32, 2
    %s34 = scalar_select %p33, 0, %s32
    %s35 = ssub.s32 %s22, %s34
    %s36 = ssub.s32 %s23, %s30
    %s37 = sor.u32 %s35, %s36
    %p38 = scmp.eq.s32.totalorder %s37, 0
    %s40 = sadd.s32 %s39, 1
    %s41 = scalar_select %p38, %s39, %s40
    %p44 = pneg %p38
    %p45 = scmp.eq.s32.totalorder %s15, 3
    %p46 = por %p44, %p45
    %p47 = scmp.ne.s32.totalorder %s39, %s42
    %p48 = scmp.eq.s32.totalorder %s15, 0
    %p49 = por %p47, %p48
    %p50 = scmp.ne.s32.totalorder %s39, %s42
    %p51 = scmp.eq.s32.totalorder %s20, 3
    %p52 = por %p50, %p51
    %p53 = scmp.ne.s32.totalorder %s42, %s43
    %p54 = scmp.eq.s32.totalorder %s20, 0
    %p55 = por %p53, %p54
    %p56 = scmp.ne.s32.totalorder %s42, %s43
    %p57 = scmp.eq.s32.totalorder %s21, 3
    %p58 = por %p56, %p57
    %p60 = scmp.ne.s32.totalorder %s43, %s59
    %p61 = scmp.eq.s32.totalorder %s21, 0
    %p62 = por %p60, %p61
    %s63 = ssub.s32 %s22, %s34
    %p64 = scmp.eq.s32.totalorder %s63, 0
    %s66 = sadd.s32 %s65, 1
    %s67 = scalar_select %p64, %s65, %s66
    %p70 = pneg %p64
    %p71 = scmp.eq.s32.totalorder %s15, 3
    %p72 = por %p70, %p71
    %p73 = scmp.ne.s32.totalorder %s65, %s68
    %p74 = scmp.eq.s32.totalorder %s15, 0
    %p75 = por %p73, %p74
    %p76 = scmp.ne.s32.totalorder %s65, %s68
    %p77 = scmp.eq.s32.totalorder %s20, 3
    %p78 = por %p76, %p77
    %p79 = scmp.ne.s32.totalorder %s68, %s69
    %p80 = scmp.eq.s32.totalorder %s20, 0
    %p81 = por %p79, %p80
    %p82 = scmp.ne.s32.totalorder %s68, %s69
    %p83 = scmp.eq.s32.totalorder %s21, 3
    %p84 = por %p82, %p83
    %p86 = scmp.ne.s32.totalorder %s69, %s85
    %p87 = scmp.eq.s32.totalorder %s21, 0
    %p88 = por %p86, %p87
    %s89 = ssub.s32 %s22, %s34
    %p90 = scmp.eq.s32.totalorder %s89, 0
    %s92 = sadd.s32 %s91, 1
    %s93 = scalar_select %p90, %s91, %s92
    %p96 = pneg %p90
    %p97 = scmp.eq.s32.totalorder %s15, 3
    %p98 = por %p96, %p97
    %p99 = scmp.ne.s32.totalorder %s91, %s94
    %p100 = scmp.eq.s32.totalorder %s15, 0
    %p101 = por %p99, %p100
    %p102 = scmp.ne.s32.totalorder %s91, %s94
    %p103 = scmp.eq.s32.totalorder %s20, 3
    %p104 = por %p102, %p103
    %p105 = scmp.ne.s32.totalorder %s94, %s95
    %p106 = scmp.eq.s32.totalorder %s20, 0
    %p107 = por %p105, %p106
    %p108 = scmp.ne.s32.totalorder %s94, %s95
    %p109 = scmp.eq.s32.totalorder %s21, 3
    %p110 = por %p108, %p109
    %p112 = scmp.ne.s32.totalorder %s95, %s111
    %p113 = scmp.eq.s32.totalorder %s21, 0
    %p114 = por %p112, %p113
    %s116 = sadd.s32 %s115, 1
    %p119 = scmp.eq.s32.totalorder %s15, 3
    %p120 = scmp.ne.s32.totalorder %s115, %s117
    %p121 = scmp.eq.s32.totalorder %s15, 0
    %p122 = por %p120, %p121
    %p123 = scmp.ne.s32.totalorder %s115, %s117
    %p124 = scmp.eq.s32.totalorder %s20, 3
    %p125 = por %p123, %p124
    %p126 = scmp.ne.s32.totalorder %s117, %s118
    %p127 = scmp.eq.s32.totalorder %s20, 0
    %p128 = por %p126, %p127
    %p129 = scmp.ne.s32.totalorder %s117, %s118
    %p130 = scmp.eq.s32.totalorder %s21, 3
    %p131 = por %p129, %p130
    %p133 = scmp.ne.s32.totalorder %s118, %s132
    %p134 = scmp.eq.s32.totalorder %s21, 0
    %p135 = por %p133, %p134
    %s137 = sadd.s32 %s136, 1
    %p140 = scmp.eq.s32.totalorder %s15, 3
    %p141 = scmp.ne.s32.totalorder %s136, %s138
    %p142 = scmp.eq.s32.totalorder %s15, 0
    %p143 = por %p141, %p142
    %p144 = scmp.ne.s32.totalorder %s136, %s138
    %p145 = scmp.eq.s32.totalorder %s20, 3
    %p146 = por %p144, %p145
    %p147 = scmp.ne.s32.totalorder %s138, %s139
    %p148 = scmp.eq.s32.totalorder %s20, 0
    %p149 = por %p147, %p148
    %p150 = scmp.ne.s32.totalorder %s138, %s139
    %p151 = scmp.eq.s32.totalorder %s21, 3
    %p152 = por %p150, %p151
    %p154 = scmp.ne.s32.totalorder %s139, %s153
    %p155 = scmp.eq.s32.totalorder %s21, 0
    %p156 = por %p154, %p155
    %s158 = sadd.s32 %s157, 1
    %p161 = scmp.eq.s32.totalorder %s15, 3
    %p162 = scmp.ne.s32.totalorder %s157, %s159
    %p163 = scmp.eq.s32.totalorder %s15, 0
    %p164 = por %p162, %p163
    %p165 = scmp.ne.s32.totalorder %s157, %s159
    %p166 = scmp.eq.s32.totalorder %s20, 3
    %p167 = por %p165, %p166
    %p168 = scmp.ne.s32.totalorder %s159, %s160
    %p169 = scmp.eq.s32.totalorder %s20, 0
    %p170 = por %p168, %p169
    %p171 = scmp.ne.s32.totalorder %s159, %s160
    %p172 = scmp.eq.s32.totalorder %s21, 3
    %p173 = por %p171, %p172
    %p175 = scmp.ne.s32.totalorder %s160, %s174
    %p176 = scmp.eq.s32.totalorder %s21, 0
    %p177 = por %p175, %p176
    %s179 = sadd.s32 %s178, 1
    %p182 = scmp.eq.s32.totalorder %s15, 3
    %p183 = scmp.ne.s32.totalorder %s178, %s180
    %p184 = scmp.eq.s32.totalorder %s15, 0
    %p185 = por %p183, %p184
    %p186 = scmp.ne.s32.totalorder %s178, %s180
    %p187 = scmp.eq.s32.totalorder %s20, 3
    %p188 = por %p186, %p187
    %p189 = scmp.ne.s32.totalorder %s180, %s181
    %p190 = scmp.eq.s32.totalorder %s20, 0
    %p191 = por %p189, %p190
    %p192 = scmp.ne.s32.totalorder %s180, %s181
    %p193 = scmp.eq.s32.totalorder %s21, 3
    %p194 = por %p192, %p193
    %p196 = scmp.ne.s32.totalorder %s181, %s195
    %p197 = scmp.eq.s32.totalorder %s21, 0
    %p198 = por %p196, %p197
    %s200 = sadd.s32 %s199, 1
    %p203 = scmp.eq.s32.totalorder %s15, 3
    %p204 = scmp.ne.s32.totalorder %s199, %s201
    %p205 = scmp.eq.s32.totalorder %s15, 0
    %p206 = por %p204, %p205
    %p207 = scmp.ne.s32.totalorder %s199, %s201
    %p208 = scmp.eq.s32.totalorder %s20, 3
    %p209 = por %p207, %p208
    %p210 = scmp.ne.s32.totalorder %s201, %s202
    %p211 = scmp.eq.s32.totalorder %s20, 0
    %p212 = por %p210, %p211
    %p213 = scmp.ne.s32.totalorder %s201, %s202
    %p214 = scmp.eq.s32.totalorder %s21, 3
    %p215 = por %p213, %p214
    %p217 = scmp.ne.s32.totalorder %s202, %s216
    %p218 = scmp.eq.s32.totalorder %s21, 0
    %p219 = por %p217, %p218
    %s221 = sadd.s32 %s220, 1
    %p224 = scmp.eq.s32.totalorder %s15, 3
    %p225 = scmp.ne.s32.totalorder %s220, %s222
    %p226 = scmp.eq.s32.totalorder %s15, 0
    %p227 = por %p225, %p226
    %p228 = scmp.ne.s32.totalorder %s220, %s222
    %p229 = scmp.eq.s32.totalorder %s20, 3
    %p230 = por %p228, %p229
    %p231 = scmp.ne.s32.totalorder %s222, %s223
    %p232 = scmp.eq.s32.totalorder %s20, 0
    %p233 = por %p231, %p232
    %p234 = scmp.ne.s32.totalorder %s222, %s223
    %p235 = scmp.eq.s32.totalorder %s21, 3
    %p236 = por %p234, %p235
    %p238 = scmp.ne.s32.totalorder %s223, %s237
    %p239 = scmp.eq.s32.totalorder %s21, 0
    %p240 = por %p238, %p239
    %s241 = ssub.s32 %s22, %s34
    %s242 = ssub.s32 %s23, %s30
    %s243 = sor.u32 %s241, %s242
    %p244 = scmp.eq.s32.totalorder %s243, 0
    %s246 = sadd.s32 %s245, 1
    %s247 = scalar_select %p244, %s245, %s246
    %p250 = pneg %p244
    %p251 = scmp.eq.s32.totalorder %s15, 3
    %p252 = por %p250, %p251
    %p253 = scmp.ne.s32.totalorder %s245, %s248
    %p254 = scmp.eq.s32.totalorder %s15, 0
    %p255 = por %p253, %p254
    %p256 = scmp.ne.s32.totalorder %s245, %s248
    %p257 = scmp.eq.s32.totalorder %s20, 3
    %p258 = por %p256, %p257
    %p259 = scmp.ne.s32.totalorder %s248, %s249
    %p260 = scmp.eq.s32.totalorder %s20, 0
    %p261 = por %p259, %p260
    %p262 = scmp.ne.s32.totalorder %s248, %s249
    %p263 = scmp.eq.s32.totalorder %s21, 3
    %p264 = por %p262, %p263
    %p266 = scmp.ne.s32.totalorder %s249, %s265
    %p267 = scmp.eq.s32.totalorder %s21, 0
    %p268 = por %p266, %p267
    %p269 = scmp.le.s32.totalorder 1, %s15
    %p270 = scmp.lt.s32.totalorder %s15, 5
    %p271 = pnand %p269, %p270
    %p272 = pneg %p271
    // Predicated region
    $region9: #{context_voted_forward.3} parent=5 // pred_check
      _
    $region10: #{context_voted_forward.3} parent=5 // pred_check_branch
      %274 = sbr.rel (%p271) target = $region12
    $region11: #{context_voted_forward.3} parent=5 // pred_region
      %s275 = ssub.s32 %s15, 1
      // Predicated region
      $region13: #{context_voted_forward.3} parent=11 // pred_check
        %p276 = pneg %p128
      $region14: #{context_voted_forward.3} parent=11 // pred_check_branch
        %278 = sbr.rel (%p276) target = $region16
      $region15: #{context_voted_forward.3} parent=11 // pred_region
        _
      $region16: #{context_voted_forward.3} parent=11 // pred_fallthru
        _
      // Predicated region
      $region17: #{context_voted_forward.3} parent=11 // pred_check
        %p279 = pneg %p149
      $region18: #{context_voted_forward.3} parent=11 // pred_check_branch
        %281 = sbr.rel (%p279) target = $region20
      $region19: #{context_voted_forward.3} parent=11 // pred_region
        _
      $region20: #{context_voted_forward.3} parent=11 // pred_fallthru
        _
      // Predicated region
      $region21: #{context_voted_forward.3} parent=11 // pred_check
        %p282 = pneg %p170
      $region22: #{context_voted_forward.3} parent=11 // pred_check_branch
        %284 = sbr.rel (%p282) target = $region24
      $region23: #{context_voted_forward.3} parent=11 // pred_region
        _
      $region24: #{context_voted_forward.3} parent=11 // pred_fallthru
        _
      // Predicated region
      $region25: #{context_voted_forward.3} parent=11 // pred_check
        %p285 = pneg %p191
      $region26: #{context_voted_forward.3} parent=11 // pred_check_branch
        %287 = sbr.rel (%p285) target = $region28
      $region27: #{context_voted_forward.3} parent=11 // pred_region
        _
      $region28: #{context_voted_forward.3} parent=11 // pred_fallthru
        _
      // Predicated region
      $region29: #{context_voted_forward.3} parent=11 // pred_check
        %p288 = pneg %p212
      $region30: #{context_voted_forward.3} parent=11 // pred_check_branch
        %290 = sbr.rel (%p288) target = $region32
      $region31: #{context_voted_forward.3} parent=11 // pred_region
        _
      $region32: #{context_voted_forward.3} parent=11 // pred_fallthru
        _
      // Predicated region
      $region33: #{context_voted_forward.3} parent=11 // pred_check
        %p291 = pneg %p233
      $region34: #{context_voted_forward.3} parent=11 // pred_check_branch
        %293 = sbr.rel (%p291) target = $region36
      $region35: #{context_voted_forward.3} parent=11 // pred_region
        _
      $region36: #{context_voted_forward.3} parent=11 // pred_fallthru
        _
    $region12: #{context_voted_forward.3} parent=5 // pred_fallthru
      _
    %p294 = scmp.lt.s32.totalorder %s15, 4
    // Predicated region
    $region37: #{context_voted_forward.3} parent=5 // pred_check
      %p295 = pneg %p294
    $region38: #{context_voted_forward.3} parent=5 // pred_check_branch
      %297 = sbr.rel (%p295) target = $region40
    $region39: #{context_voted_forward.3} parent=5 // pred_region
      // Predicated region
      $region41: #{context_voted_forward.3} parent=39 // pred_check
        %p298 = pneg %p49
      $region42: #{context_voted_forward.3} parent=39 // pred_check_branch
        %300 = sbr.rel (%p298) target = $region44
      $region43: #{context_voted_forward.3} parent=39 // pred_region
        %s301 = smul.u32 16, %s23
        %p302 = scmp.lt.s32.totalorder %s22, 1
        %s303 = scalar_select %p302, %s22, 1
        %p304 = scmp.lt.s32.totalorder %s301, 31
        %s305 = scalar_select %p304, %s301, 31
        %s306 = smul.addr %s303, 32
        %s307 = sadd.s32 %s305, %s306
        %s308 = smul.addr %s307, 8
        %s309 = scalar_lea.vmem %s0, %s308
        %s310 = smul.u32 16, %s23
      $region44: #{context_voted_forward.3} parent=39 // pred_fallthru
        _
      // Predicated region
      $region45: #{context_voted_forward.3} parent=39 // pred_check
        %p311 = pneg %p75
      $region46: #{context_voted_forward.3} parent=39 // pred_check_branch
        %313 = sbr.rel (%p311) target = $region48
      $region47: #{context_voted_forward.3} parent=39 // pred_region
        %p314 = scmp.lt.s32.totalorder %s22, 1
        %s315 = scalar_select %p314, %s22, 1
        %s316 = smul.addr %s315, 4
        %s317 = smul.addr %s316, 8
        %s318 = scalar_lea.vmem %s1, %s317
      $region48: #{context_voted_forward.3} parent=39 // pred_fallthru
        _
      // Predicated region
      $region49: #{context_voted_forward.3} parent=39 // pred_check
        %p319 = pneg %p101
      $region50: #{context_voted_forward.3} parent=39 // pred_check_branch
        %321 = sbr.rel (%p319) target = $region52
      $region51: #{context_voted_forward.3} parent=39 // pred_region
        %p322 = scmp.lt.s32.totalorder %s22, 1
        %s323 = scalar_select %p322, %s22, 1
        %s324 = smul.addr %s323, 4
        %s325 = smul.addr %s324, 8
        %s326 = scalar_lea.vmem %s2, %s325
      $region52: #{context_voted_forward.3} parent=39 // pred_fallthru
        _
    $region40: #{context_voted_forward.3} parent=5 // pred_fallthru
      _
    %p327 = scmp.le.s32.totalorder 1, %s15
    %p328 = scmp.lt.s32.totalorder %s15, 5
    %p329 = pnand %p327, %p328
    %p330 = pneg %p329
    // Predicated region
    $region53: #{context_voted_forward.3} parent=5 // pred_check
      _
    $region54: #{context_voted_forward.3} parent=5 // pred_check_branch
      %332 = sbr.rel (%p329) target = $region56
    $region55: #{context_voted_forward.3} parent=5 // pred_region
      %s333 = ssub.s32 %s15, 1
      %s334 = smul.u32 16, %s25
      %p335 = scmp.lt.s32.totalorder %s24, 1
      %s336 = scalar_select %p335, %s24, 1
      %p337 = scmp.lt.s32.totalorder %s334, 31
      %s338 = scalar_select %p337, %s334, 31
      %s339 = smul.addr %s336, 32
      %s340 = sadd.s32 %s338, %s339
      %s341 = smul.addr %s340, 8
      %s342 = scalar_lea.vmem %s0, %s341
      %p343 = pneg %p55
      %p344 = pneg %p52
      %p345 = scmp.lt.s32.totalorder %s24, 1
      %s346 = scalar_select %p345, %s24, 1
      %s347 = smul.addr %s346, 4
      %s348 = smul.addr %s347, 8
      %s349 = scalar_lea.vmem %s1, %s348
      %p350 = pneg %p81
      %p351 = pneg %p78
      %p352 = scmp.lt.s32.totalorder %s24, 1
      %s353 = scalar_select %p352, %s24, 1
      %s354 = smul.addr %s353, 4
      %s355 = smul.addr %s354, 8
      %s356 = scalar_lea.vmem %s2, %s355
      %p357 = pneg %p107
      %p358 = pneg %p104
      %p359 = pneg %p128
      %p360 = pneg %p125
      %p361 = pneg %p149
      %p362 = pneg %p146
      %p363 = pneg %p170
      %p364 = pneg %p167
      %p365 = pneg %p191
      %p366 = pneg %p188
      %p367 = pneg %p212
      %p368 = pneg %p209
      %p369 = pneg %p233
      %p370 = pneg %p230
      %p371 = pneg %p261
      %p372 = pneg %p258
      %s373 = smul.u32 16, %s25
      %p374 = scmp.lt.s32.totalorder %s24, 1
      %s375 = scalar_select %p374, %s24, 1
      %p376 = scmp.lt.s32.totalorder %s373, 31
      %s377 = scalar_select %p376, %s373, 31
      %s378 = smul.addr %s375, 32
      %s379 = sadd.s32 %s377, %s378
      %s380 = smul.addr %s379, 8
      %s381 = scalar_lea.vmem %s9, %s380
      %s382 = smul.u32 16, %s25
      %p383 = scmp.lt.s32.totalorder %s24, 1
      %s384 = scalar_select %p383, %s24, 1
      %p385 = scmp.lt.s32.totalorder %s382, 31
      %s386 = scalar_select %p385, %s382, 31
      %s387 = smul.addr %s384, 32
      %s388 = sadd.s32 %s386, %s387
      %s389 = smul.addr %s388, 8
      %s390 = scalar_lea.vmem %s0, %s389
      %s391 = smul.u32 16, %s25
      %p392 = scmp.lt.s32.totalorder %s24, 1
      %s393 = scalar_select %p392, %s24, 1
      %s394 = smul.addr %s393, 4
      %s395 = smul.addr %s394, 8
      %s396 = scalar_lea.vmem %s1, %s395
      %p397 = scmp.lt.s32.totalorder %s24, 1
      %s398 = scalar_select %p397, %s24, 1
      %s399 = smul.addr %s398, 4
      %s400 = smul.addr %s399, 8
      %s401 = scalar_lea.vmem %s2, %s400
      %s402 = smul.u32 16, %s25
      %p403 = scmp.lt.s32.totalorder %s24, 1
      %s404 = scalar_select %p403, %s24, 1
      %p405 = scmp.lt.s32.totalorder %s402, 31
      %s406 = scalar_select %p405, %s402, 31
      %s407 = smul.addr %s404, 32
      %s408 = sadd.s32 %s406, %s407
      %s409 = smul.addr %s408, 8
      %s410 = scalar_lea.vmem %s9, %s409
      %s411 = smul.u32 16, %s25
      %v412 = vld [vmem:[%s390] sm:$0xff]
      %v413 = vld [vmem:[%s390 + $0x8] sm:$0xff]
      %v414 = vld [vmem:[%s390 + $0x10] sm:$0xff]
      %v415 = vld [vmem:[%s390 + $0x18] sm:$0xff]
      %v416 = vld [vmem:[%s390 + $0x20] sm:$0xff]
      %v417 = vld [vmem:[%s390 + $0x28] sm:$0xff]
      %v418 = vld [vmem:[%s390 + $0x30] sm:$0xff]
      %v419 = vld [vmem:[%s390 + $0x38] sm:$0xff]
      %v420 = vld [vmem:[%s390 + $0x40] sm:$0xff]
      %v421 = vld [vmem:[%s390 + $0x48] sm:$0xff]
      %v422 = vld [vmem:[%s390 + $0x50] sm:$0xff]
      %v423 = vld [vmem:[%s390 + $0x58] sm:$0xff]
      %v424 = vld [vmem:[%s390 + $0x60] sm:$0xff]
      %v425 = vld [vmem:[%s390 + $0x68] sm:$0xff]
      %v426 = vld [vmem:[%s390 + $0x70] sm:$0xff]
      %v427 = vld [vmem:[%s390 + $0x78] sm:$0xff]
      %v428 = vld [vmem:[%s3] sm:$0xff]
      %v429 = vld [vmem:[%s3 + $0x8] sm:$0xff]
      %v430 = vld [vmem:[%s3 + $0x10] sm:$0xff]
      %v431 = vld [vmem:[%s3 + $0x18] sm:$0xff]
      %v432 = vld [vmem:[%s3 + $0x20] sm:$0xff]
      %v433 = vld [vmem:[%s3 + $0x28] sm:$0xff]
      %v434 = vld [vmem:[%s3 + $0x30] sm:$0xff]
      %v435 = vld [vmem:[%s3 + $0x38] sm:$0xff]
      %v436 = vld [vmem:[%s3 + $0x40] sm:$0xff]
      %v437 = vld [vmem:[%s3 + $0x48] sm:$0xff]
      %v438 = vld [vmem:[%s3 + $0x50] sm:$0xff]
      %v439 = vld [vmem:[%s3 + $0x58] sm:$0xff]
      %v440 = vld [vmem:[%s3 + $0x60] sm:$0xff]
      %v441 = vld [vmem:[%s3 + $0x68] sm:$0xff]
      %v442 = vld [vmem:[%s3 + $0x70] sm:$0xff]
      %v443 = vld [vmem:[%s3 + $0x78] sm:$0xff]
      %v444 = vld [vmem:[%s4] sm:$0x1]
      %v446 = vlaneseq
      %v447 = vshrl.u32 %v446, 7
      %v448 = vsub.s32 0, %v447
      %v449 = vrot.slane %v444, %v448
      %451 = vmatprep.subr.mxu0 0.0
      %452 = vmatpush1.msra.mxu0 %v443
      %453 = vmatprep.subr.mxu0 0.0
      %454 = vmatpush1.msra.mxu0 %v442
      %455 = vmatprep.subr.mxu0 0.0
      %456 = vmatpush1.msra.mxu0 %v441
      %457 = vmatprep.subr.mxu0 0.0
      %458 = vmatpush1.msra.mxu0 %v440
      %459 = vmatprep.subr.mxu0 0.0
      %460 = vmatpush1.msra.mxu0 %v439
      %461 = vmatprep.subr.mxu0 0.0
      %462 = vmatpush1.msra.mxu0 %v438
      %463 = vmatprep.subr.mxu0 0.0
      %464 = vmatpush1.msra.mxu0 %v437
      %465 = vmatprep.subr.mxu0 0.0
      %466 = vmatpush1.msra.mxu0 %v436
      %467 = vmatprep.subr.mxu0 0.0
      %468 = vmatpush1.msra.mxu0 %v435
      %469 = vmatprep.subr.mxu0 0.0
      %470 = vmatpush1.msra.mxu0 %v434
      %471 = vmatprep.subr.mxu0 0.0
      %472 = vmatpush1.msra.mxu0 %v433
      %473 = vmatprep.subr.mxu0 0.0
      %474 = vmatpush1.msra.mxu0 %v432
      %475 = vmatprep.subr.mxu0 0.0
      %476 = vmatpush1.msra.mxu0 %v431
      %477 = vmatprep.subr.mxu0 0.0
      %478 = vmatpush1.msra.mxu0 %v430
      %479 = vmatprep.subr.mxu0 0.0
      %480 = vmatpush1.msra.mxu0 %v429
      %481 = vmatprep.subr.mxu0 0.0
      %482 = vmatpush1.msra.mxu0 %v428
      %483 = vmatprep.subr.mxu0 0.0
      %484 = vmatpush2.msra.mxu0 0.0
      %485 = vmatprep.subr.mxu0 0.0
      %486 = vmatpush2.msra.mxu0 0.0
      %487 = vmatprep.subr.mxu0 0.0
      %488 = vmatpush2.msra.mxu0 0.0
      %489 = vmatprep.subr.mxu0 0.0
      %490 = vmatpush2.msra.mxu0 0.0
      %491 = vmatprep.subr.mxu0 0.0
      %492 = vmatpush2.msra.mxu0 0.0
      %493 = vmatprep.subr.mxu0 0.0
      %494 = vmatpush2.msra.mxu0 0.0
      %495 = vmatprep.subr.mxu0 0.0
      %496 = vmatpush2.msra.mxu0 0.0
      %497 = vmatprep.subr.mxu0 0.0
      %498 = vmatpush2.msra.mxu0 0.0
      %499 = vmatprep.subr.mxu0 0.0
      %500 = vmatpush2.msra.mxu0 0.0
      %501 = vmatprep.subr.mxu0 0.0
      %502 = vmatpush2.msra.mxu0 0.0
      %503 = vmatprep.subr.mxu0 0.0
      %504 = vmatpush2.msra.mxu0 0.0
      %505 = vmatprep.subr.mxu0 0.0
      %506 = vmatpush2.msra.mxu0 0.0
      %507 = vmatprep.subr.mxu0 0.0
      %508 = vmatpush2.msra.mxu0 0.0
      %509 = vmatprep.subr.mxu0 0.0
      %510 = vmatpush2.msra.mxu0 0.0
      %511 = vmatprep.subr.mxu0 0.0
      %512 = vmatpush2.msra.mxu0 0.0
      %513 = vmatprep.subr.mxu0 0.0
      %514 = vmatpush2.msra.mxu0 0.0
      %515 = vmatprep.mubr.f32.mxu0 0.0
      %516 = vmatmul.mubr.f32.gmra.mxu0 %v412
      %v517 = vpop.f32.mrf.mxu0
      %v518 = vadd.f32 %v449, %v517
      %v519 = vpop.f32.mrf.mxu0
      %520 = vmatprep.mubr.f32.mxu0 0.0
      %521 = vmatmul.mubr.f32.gmra.mxu0 %v413
      %v522 = vpop.f32.mrf.mxu0
      %v523 = vadd.f32 %v449, %v522
      %v524 = vpop.f32.mrf.mxu0
      %525 = vmatprep.mubr.f32.mxu0 0.0
      %526 = vmatmul.mubr.f32.gmra.mxu0 %v414
      %v527 = vpop.f32.mrf.mxu0
      %v528 = vadd.f32 %v449, %v527
      %v529 = vpop.f32.mrf.mxu0
      %530 = vmatprep.mubr.f32.mxu0 0.0
      %531 = vmatmul.mubr.f32.gmra.mxu0 %v415
      %v532 = vpop.f32.mrf.mxu0
      %v533 = vadd.f32 %v449, %v532
      %v534 = vpop.f32.mrf.mxu0
      %535 = vmatprep.mubr.f32.mxu0 0.0
      %536 = vmatmul.mubr.f32.gmra.mxu0 %v416
      %v537 = vpop.f32.mrf.mxu0
      %v538 = vadd.f32 %v449, %v537
      %v539 = vpop.f32.mrf.mxu0
      %540 = vmatprep.mubr.f32.mxu0 0.0
      %541 = vmatmul.mubr.f32.gmra.mxu0 %v417
      %v542 = vpop.f32.mrf.mxu0
      %v543 = vadd.f32 %v449, %v542
      %v544 = vpop.f32.mrf.mxu0
      %545 = vmatprep.mubr.f32.mxu0 0.0
      %546 = vmatmul.mubr.f32.gmra.mxu0 %v418
      %v547 = vpop.f32.mrf.mxu0
      %v548 = vadd.f32 %v449, %v547
      %v549 = vpop.f32.mrf.mxu0
      %550 = vmatprep.mubr.f32.mxu0 0.0
      %551 = vmatmul.mubr.f32.gmra.mxu0 %v419
      %v552 = vpop.f32.mrf.mxu0
      %v553 = vadd.f32 %v449, %v552
      %v554 = vpop.f32.mrf.mxu0
      %555 = vmatprep.mubr.f32.mxu0 0.0
      %556 = vmatmul.mubr.f32.gmra.mxu0 %v420
      %v557 = vpop.f32.mrf.mxu0
      %v558 = vadd.f32 %v449, %v557
      %v559 = vpop.f32.mrf.mxu0
      %560 = vmatprep.mubr.f32.mxu0 0.0
      %561 = vmatmul.mubr.f32.gmra.mxu0 %v421
      %v562 = vpop.f32.mrf.mxu0
      %v563 = vadd.f32 %v449, %v562
      %v564 = vpop.f32.mrf.mxu0
      %565 = vmatprep.mubr.f32.mxu0 0.0
      %566 = vmatmul.mubr.f32.gmra.mxu0 %v422
      %v567 = vpop.f32.mrf.mxu0
      %v568 = vadd.f32 %v449, %v567
      %v569 = vpop.f32.mrf.mxu0
      %570 = vmatprep.mubr.f32.mxu0 0.0
      %571 = vmatmul.mubr.f32.gmra.mxu0 %v423
      %v572 = vpop.f32.mrf.mxu0
      %v573 = vadd.f32 %v449, %v572
      %v574 = vpop.f32.mrf.mxu0
      %575 = vmatprep.mubr.f32.mxu0 0.0
      %576 = vmatmul.mubr.f32.gmra.mxu0 %v424
      %v577 = vpop.f32.mrf.mxu0
      %v578 = vadd.f32 %v449, %v577
      %v579 = vpop.f32.mrf.mxu0
      %580 = vmatprep.mubr.f32.mxu0 0.0
      %581 = vmatmul.mubr.f32.gmra.mxu0 %v425
      %v582 = vpop.f32.mrf.mxu0
      %v583 = vadd.f32 %v449, %v582
      %v584 = vpop.f32.mrf.mxu0
      %585 = vmatprep.mubr.f32.mxu0 0.0
      %586 = vmatmul.mubr.f32.gmra.mxu0 %v426
      %v587 = vpop.f32.mrf.mxu0
      %v588 = vadd.f32 %v449, %v587
      %v589 = vpop.f32.mrf.mxu0
      %590 = vmatprep.mubr.f32.mxu0 0.0
      %591 = vmatmul.mubr.f32.gmra.mxu0 %v427
      %v592 = vpop.f32.mrf.mxu0
      %v593 = vadd.f32 %v449, %v592
      %v594 = vpop.f32.mrf.mxu0
      %595 = vdwg.mxu0
      %v596 = vld [vmem:[%s396] sm:$0xff]
      %v597 = vld [vmem:[%s396 + $0x8] sm:$0xff]
      %v598 = vld [vmem:[%s396 + $0x10] sm:$0xff]
      %v599 = vld [vmem:[%s396 + $0x18] sm:$0xff]
      %v600 = vld [vmem:[%s401] sm:$0xff]
      %v601 = vld [vmem:[%s401 + $0x8] sm:$0xff]
      %v602 = vld [vmem:[%s401 + $0x10] sm:$0xff]
      %v603 = vld [vmem:[%s401 + $0x18] sm:$0xff]
      %vm604 = vcmask 523264
      %v606 = vsel %vm604, %v518, 0
      %v609 = vsel %vm604, %v523, 0
      %v612 = vsel %vm604, %v528, 0
      %v615 = vsel %vm604, %v533, 0
      %v618 = vsel %vm604, %v538, 0
      %v621 = vsel %vm604, %v543, 0
      %v624 = vsel %vm604, %v548, 0
      %v627 = vsel %vm604, %v553, 0
      %v630 = vsel %vm604, %v558, 0
      %v633 = vsel %vm604, %v563, 0
      %v636 = vsel %vm604, %v568, 0
      %v639 = vsel %vm604, %v573, 0
      %v642 = vsel %vm604, %v578, 0
      %v645 = vsel %vm604, %v583, 0
      %v648 = vsel %vm604, %v588, 0
      %v651 = vsel %vm604, %v593, 0
      %v654 = vsel %vm604, %v596, 0
      %v657 = vsel %vm604, %v597, 0
      %v660 = vsel %vm604, %v598, 0
      %v663 = vsel %vm604, %v599, 0
      %665 = vmatprep.subr.mxu0 0.0
      %666 = vmatpush1.xpose.msra.mxu0 0.0
      %667 = vmatprep.subr.mxu0 0.0
      %668 = vmatpush1.xpose.msra.mxu0 0.0
      %669 = vmatprep.subr.mxu0 0.0
      %670 = vmatpush1.xpose.msra.mxu0 0.0
      %671 = vmatprep.subr.mxu0 0.0
      %672 = vmatpush1.xpose.msra.mxu0 0.0
      %673 = vmatprep.subr.mxu0 0.0
      %674 = vmatpush1.xpose.msra.mxu0 0.0
      %675 = vmatprep.subr.mxu0 0.0
      %676 = vmatpush1.xpose.msra.mxu0 0.0
      %677 = vmatprep.subr.mxu0 0.0
      %678 = vmatpush1.xpose.msra.mxu0 0.0
      %679 = vmatprep.subr.mxu0 0.0
      %680 = vmatpush1.xpose.msra.mxu0 0.0
      %681 = vmatprep.subr.mxu0 0.0
      %682 = vmatpush1.xpose.msra.mxu0 0.0
      %683 = vmatprep.subr.mxu0 0.0
      %684 = vmatpush1.xpose.msra.mxu0 0.0
      %685 = vmatprep.subr.mxu0 0.0
      %686 = vmatpush1.xpose.msra.mxu0 0.0
      %687 = vmatprep.subr.mxu0 0.0
      %688 = vmatpush1.xpose.msra.mxu0 0.0
      %689 = vmatprep.subr.mxu0 0.0
      %690 = vmatpush1.xpose.msra.mxu0 %v663
      %691 = vmatprep.subr.mxu0 0.0
      %692 = vmatpush1.xpose.msra.mxu0 %v660
      %693 = vmatprep.subr.mxu0 0.0
      %694 = vmatpush1.xpose.msra.mxu0 %v657
      %695 = vmatprep.subr.mxu0 0.0
      %696 = vmatpush1.xpose.msra.mxu0 %v654
      %697 = vmatprep.subr.mxu0 0.0
      %698 = vmatpush2.xpose.msra.mxu0 0.0
      %699 = vmatprep.subr.mxu0 0.0
      %700 = vmatpush2.xpose.msra.mxu0 0.0
      %701 = vmatprep.subr.mxu0 0.0
      %702 = vmatpush2.xpose.msra.mxu0 0.0
      %703 = vmatprep.subr.mxu0 0.0
      %704 = vmatpush2.xpose.msra.mxu0 0.0
      %705 = vmatprep.subr.mxu0 0.0
      %706 = vmatpush2.xpose.msra.mxu0 0.0
      %707 = vmatprep.subr.mxu0 0.0
      %708 = vmatpush2.xpose.msra.mxu0 0.0
      %709 = vmatprep.subr.mxu0 0.0
      %710 = vmatpush2.xpose.msra.mxu0 0.0
      %711 = vmatprep.subr.mxu0 0.0
      %712 = vmatpush2.xpose.msra.mxu0 0.0
      %713 = vmatprep.subr.mxu0 0.0
      %714 = vmatpush2.xpose.msra.mxu0 0.0
      %715 = vmatprep.subr.mxu0 0.0
      %716 = vmatpush2.xpose.msra.mxu0 0.0
      %717 = vmatprep.subr.mxu0 0.0
      %718 = vmatpush2.xpose.msra.mxu0 0.0
      %719 = vmatprep.subr.mxu0 0.0
      %720 = vmatpush2.xpose.msra.mxu0 0.0
      %721 = vmatprep.subr.mxu0 0.0
      %722 = vmatpush2.xpose.msra.mxu0 0.0
      %723 = vmatprep.subr.mxu0 0.0
      %724 = vmatpush2.xpose.msra.mxu0 0.0
      %725 = vmatprep.subr.mxu0 0.0
      %726 = vmatpush2.xpose.msra.mxu0 0.0
      %727 = vmatprep.subr.mxu0 0.0
      %728 = vmatpush2.xpose.msra.mxu0 0.0
      %729 = vmatprep.mubr.f32.mxu0 0.0
      %730 = vmatmul.mubr.f32.gmra.mxu0 %v606
      %v731 = vpop.f32.mrf.mxu0
      %v732 = vadd.f32 0.0, %v731
      %v733 = vpop.f32.mrf.mxu0
      %734 = vmatprep.mubr.f32.mxu0 0.0
      %735 = vmatmul.mubr.f32.gmra.mxu0 %v609
      %v736 = vpop.f32.mrf.mxu0
      %v737 = vadd.f32 0.0, %v736
      %v738 = vpop.f32.mrf.mxu0
      %739 = vmatprep.mubr.f32.mxu0 0.0
      %740 = vmatmul.mubr.f32.gmra.mxu0 %v612
      %v741 = vpop.f32.mrf.mxu0
      %v742 = vadd.f32 0.0, %v741
      %v743 = vpop.f32.mrf.mxu0
      %744 = vmatprep.mubr.f32.mxu0 0.0
      %745 = vmatmul.mubr.f32.gmra.mxu0 %v615
      %v746 = vpop.f32.mrf.mxu0
      %v747 = vadd.f32 0.0, %v746
      %v748 = vpop.f32.mrf.mxu0
      %749 = vmatprep.mubr.f32.mxu0 0.0
      %750 = vmatmul.mubr.f32.gmra.mxu0 %v618
      %v751 = vpop.f32.mrf.mxu0
      %v752 = vadd.f32 0.0, %v751
      %v753 = vpop.f32.mrf.mxu0
      %754 = vmatprep.mubr.f32.mxu0 0.0
      %755 = vmatmul.mubr.f32.gmra.mxu0 %v621
      %v756 = vpop.f32.mrf.mxu0
      %v757 = vadd.f32 0.0, %v756
      %v758 = vpop.f32.mrf.mxu0
      %759 = vmatprep.mubr.f32.mxu0 0.0
      %760 = vmatmul.mubr.f32.gmra.mxu0 %v624
      %v761 = vpop.f32.mrf.mxu0
      %v762 = vadd.f32 0.0, %v761
      %v763 = vpop.f32.mrf.mxu0
      %764 = vmatprep.mubr.f32.mxu0 0.0
      %765 = vmatmul.mubr.f32.gmra.mxu0 %v627
      %v766 = vpop.f32.mrf.mxu0
      %v767 = vadd.f32 0.0, %v766
      %v768 = vpop.f32.mrf.mxu0
      %769 = vmatprep.mubr.f32.mxu0 0.0
      %770 = vmatmul.mubr.f32.gmra.mxu0 %v630
      %v771 = vpop.f32.mrf.mxu0
      %v772 = vadd.f32 0.0, %v771
      %v773 = vpop.f32.mrf.mxu0
      %774 = vmatprep.mubr.f32.mxu0 0.0
      %775 = vmatmul.mubr.f32.gmra.mxu0 %v633
      %v776 = vpop.f32.mrf.mxu0
      %v777 = vadd.f32 0.0, %v776
      %v778 = vpop.f32.mrf.mxu0
      %779 = vmatprep.mubr.f32.mxu0 0.0
      %780 = vmatmul.mubr.f32.gmra.mxu0 %v636
      %v781 = vpop.f32.mrf.mxu0
      %v782 = vadd.f32 0.0, %v781
      %v783 = vpop.f32.mrf.mxu0
      %784 = vmatprep.mubr.f32.mxu0 0.0
      %785 = vmatmul.mubr.f32.gmra.mxu0 %v639
      %v786 = vpop.f32.mrf.mxu0
      %v787 = vadd.f32 0.0, %v786
      %v788 = vpop.f32.mrf.mxu0
      %789 = vmatprep.mubr.f32.mxu0 0.0
      %790 = vmatmul.mubr.f32.gmra.mxu0 %v642
      %v791 = vpop.f32.mrf.mxu0
      %v792 = vadd.f32 0.0, %v791
      %v793 = vpop.f32.mrf.mxu0
      %794 = vmatprep.mubr.f32.mxu0 0.0
      %795 = vmatmul.mubr.f32.gmra.mxu0 %v645
      %v796 = vpop.f32.mrf.mxu0
      %v797 = vadd.f32 0.0, %v796
      %v798 = vpop.f32.mrf.mxu0
      %799 = vmatprep.mubr.f32.mxu0 0.0
      %800 = vmatmul.mubr.f32.gmra.mxu0 %v648
      %v801 = vpop.f32.mrf.mxu0
      %v802 = vadd.f32 0.0, %v801
      %v803 = vpop.f32.mrf.mxu0
      %804 = vmatprep.mubr.f32.mxu0 0.0
      %805 = vmatmul.mubr.f32.gmra.mxu0 %v651
      %v806 = vpop.f32.mrf.mxu0
      %v807 = vadd.f32 0.0, %v806
      %v808 = vpop.f32.mrf.mxu0
      %809 = vdwg.mxu0
      %vm810 = vcmask 261120
      %v811 = vsel %vm810, %v732, -inf
      %812 = vmax.xlane.f32.xlu0 %v811
      %v813 = vpop.xlane.xlu0 %812
      %v814 = vsel %vm810, %v737, -inf
      %815 = vmax.xlane.f32.xlu0 %v814
      %v816 = vpop.xlane.xlu0 %815
      %v817 = vsel %vm810, %v742, -inf
      %818 = vmax.xlane.f32.xlu0 %v817
      %v819 = vpop.xlane.xlu0 %818
      %v820 = vsel %vm810, %v747, -inf
      %821 = vmax.xlane.f32.xlu0 %v820
      %v822 = vpop.xlane.xlu0 %821
      %v823 = vsel %vm810, %v752, -inf
      %824 = vmax.xlane.f32.xlu0 %v823
      %v825 = vpop.xlane.xlu0 %824
      %v826 = vsel %vm810, %v757, -inf
      %827 = vmax.xlane.f32.xlu0 %v826
      %v828 = vpop.xlane.xlu0 %827
      %v829 = vsel %vm810, %v762, -inf
      %830 = vmax.xlane.f32.xlu0 %v829
      %v831 = vpop.xlane.xlu0 %830
      %v832 = vsel %vm810, %v767, -inf
      %833 = vmax.xlane.f32.xlu0 %v832
      %v834 = vpop.xlane.xlu0 %833
      %v835 = vsel %vm810, %v772, -inf
      %836 = vmax.xlane.f32.xlu0 %v835
      %v837 = vpop.xlane.xlu0 %836
      %v838 = vsel %vm810, %v777, -inf
      %839 = vmax.xlane.f32.xlu0 %v838
      %v840 = vpop.xlane.xlu0 %839
      %v841 = vsel %vm810, %v782, -inf
      %842 = vmax.xlane.f32.xlu0 %v841
      %v843 = vpop.xlane.xlu0 %842
      %v844 = vsel %vm810, %v787, -inf
      %845 = vmax.xlane.f32.xlu0 %v844
      %v846 = vpop.xlane.xlu0 %845
      %v847 = vsel %vm810, %v792, -inf
      %848 = vmax.xlane.f32.xlu0 %v847
      %v849 = vpop.xlane.xlu0 %848
      %v850 = vsel %vm810, %v797, -inf
      %851 = vmax.xlane.f32.xlu0 %v850
      %v852 = vpop.xlane.xlu0 %851
      %v853 = vsel %vm810, %v802, -inf
      %854 = vmax.xlane.f32.xlu0 %v853
      %v855 = vpop.xlane.xlu0 %854
      %v856 = vsel %vm810, %v807, -inf
      %857 = vmax.xlane.f32.xlu0 %v856
      %v858 = vpop.xlane.xlu0 %857
      %v859 = vsub.f32 %v732, %v813
      %v860 = vsub.f32 %v737, %v816
      %v861 = vsub.f32 %v742, %v819
      %v862 = vsub.f32 %v747, %v822
      %v863 = vsub.f32 %v752, %v825
      %v864 = vsub.f32 %v757, %v828
      %v865 = vsub.f32 %v762, %v831
      %v866 = vsub.f32 %v767, %v834
      %v867 = vsub.f32 %v772, %v837
      %v868 = vsub.f32 %v777, %v840
      %v869 = vsub.f32 %v782, %v843
      %v870 = vsub.f32 %v787, %v846
      %v871 = vsub.f32 %v792, %v849
      %v872 = vsub.f32 %v797, %v852
      %v873 = vsub.f32 %v802, %v855
      %v874 = vsub.f32 %v807, %v858
      %v875 = vmul.f32 %v859, 1.442695
      %v876 = vpow.pop %v875
      %v877 = vmul.f32 %v860, 1.442695
      %v878 = vpow.pop %v877
      %v879 = vmul.f32 %v861, 1.442695
      %v880 = vpow.pop %v879
      %v881 = vmul.f32 %v862, 1.442695
      %v882 = vpow.pop %v881
      %v883 = vmul.f32 %v863, 1.442695
      %v884 = vpow.pop %v883
      %v885 = vmul.f32 %v864, 1.442695
      %v886 = vpow.pop %v885
      %v887 = vmul.f32 %v865, 1.442695
      %v888 = vpow.pop %v887
      %v889 = vmul.f32 %v866, 1.442695
      %v890 = vpow.pop %v889
      %v891 = vmul.f32 %v867, 1.442695
      %v892 = vpow.pop %v891
      %v893 = vmul.f32 %v868, 1.442695
      %v894 = vpow.pop %v893
      %v895 = vmul.f32 %v869, 1.442695
      %v896 = vpow.pop %v895
      %v897 = vmul.f32 %v870, 1.442695
      %v898 = vpow.pop %v897
      %v899 = vmul.f32 %v871, 1.442695
      %v900 = vpow.pop %v899
      %v901 = vmul.f32 %v872, 1.442695
      %v902 = vpow.pop %v901
      %v903 = vmul.f32 %v873, 1.442695
      %v904 = vpow.pop %v903
      %v905 = vmul.f32 %v874, 1.442695
      %v906 = vpow.pop %v905
      %v907 = vsel %vm810, %v876, 0.0
      %908 = vadd.xlane.f32.xlu0 %v907
      %v909 = vpop.xlane.xlu0 %908
      %v910 = vsel %vm810, %v878, 0.0
      %911 = vadd.xlane.f32.xlu0 %v910
      %v912 = vpop.xlane.xlu0 %911
      %v913 = vsel %vm810, %v880, 0.0
      %914 = vadd.xlane.f32.xlu0 %v913
      %v915 = vpop.xlane.xlu0 %914
      %v916 = vsel %vm810, %v882, 0.0
      %917 = vadd.xlane.f32.xlu0 %v916
      %v918 = vpop.xlane.xlu0 %917
      %v919 = vsel %vm810, %v884, 0.0
      %920 = vadd.xlane.f32.xlu0 %v919
      %v921 = vpop.xlane.xlu0 %920
      %v922 = vsel %vm810, %v886, 0.0
      %923 = vadd.xlane.f32.xlu0 %v922
      %v924 = vpop.xlane.xlu0 %923
      %v925 = vsel %vm810, %v888, 0.0
      %926 = vadd.xlane.f32.xlu0 %v925
      %v927 = vpop.xlane.xlu0 %926
      %v928 = vsel %vm810, %v890, 0.0
      %929 = vadd.xlane.f32.xlu0 %v928
      %v930 = vpop.xlane.xlu0 %929
      %v931 = vsel %vm810, %v892, 0.0
      %932 = vadd.xlane.f32.xlu0 %v931
      %v933 = vpop.xlane.xlu0 %932
      %v934 = vsel %vm810, %v894, 0.0
      %935 = vadd.xlane.f32.xlu0 %v934
      %v936 = vpop.xlane.xlu0 %935
      %v937 = vsel %vm810, %v896, 0.0
      %938 = vadd.xlane.f32.xlu0 %v937
      %v939 = vpop.xlane.xlu0 %938
      %v940 = vsel %vm810, %v898, 0.0
      %941 = vadd.xlane.f32.xlu0 %v940
      %v942 = vpop.xlane.xlu0 %941
      %v943 = vsel %vm810, %v900, 0.0
      %944 = vadd.xlane.f32.xlu0 %v943
      %v945 = vpop.xlane.xlu0 %944
      %v946 = vsel %vm810, %v902, 0.0
      %947 = vadd.xlane.f32.xlu0 %v946
      %v948 = vpop.xlane.xlu0 %947
      %v949 = vsel %vm810, %v904, 0.0
      %950 = vadd.xlane.f32.xlu0 %v949
      %v951 = vpop.xlane.xlu0 %950
      %v952 = vsel %vm810, %v906, 0.0
      %953 = vadd.xlane.f32.xlu0 %v952
      %v954 = vpop.xlane.xlu0 %953
      %v955 = vrcp.pop %v909
      %v956 = vrcp.pop %v912
      %v957 = vrcp.pop %v915
      %v958 = vrcp.pop %v918
      %v959 = vrcp.pop %v921
      %v960 = vrcp.pop %v924
      %v961 = vrcp.pop %v927
      %v962 = vrcp.pop %v930
      %v963 = vrcp.pop %v933
      %v964 = vrcp.pop %v936
      %v965 = vrcp.pop %v939
      %v966 = vrcp.pop %v942
      %v967 = vrcp.pop %v945
      %v968 = vrcp.pop %v948
      %v969 = vrcp.pop %v951
      %v970 = vrcp.pop %v954
      %v971 = vmul.f32 %v876, %v955
      %v972 = vmul.f32 %v878, %v956
      %v973 = vmul.f32 %v880, %v957
      %v974 = vmul.f32 %v882, %v958
      %v975 = vmul.f32 %v884, %v959
      %v976 = vmul.f32 %v886, %v960
      %v977 = vmul.f32 %v888, %v961
      %v978 = vmul.f32 %v890, %v962
      %v979 = vmul.f32 %v892, %v963
      %v980 = vmul.f32 %v894, %v964
      %v981 = vmul.f32 %v896, %v965
      %v982 = vmul.f32 %v898, %v966
      %v983 = vmul.f32 %v900, %v967
      %v984 = vmul.f32 %v902, %v968
      %v985 = vmul.f32 %v904, %v969
      %v986 = vmul.f32 %v906, %v970
      %v988 = vsel %vm810, %v971, 0
      %v991 = vsel %vm810, %v972, 0
      %v994 = vsel %vm810, %v973, 0
      %v997 = vsel %vm810, %v974, 0
      %v1000 = vsel %vm810, %v975, 0
      %v1003 = vsel %vm810, %v976, 0
      %v1006 = vsel %vm810, %v977, 0
      %v1009 = vsel %vm810, %v978, 0
      %v1012 = vsel %vm810, %v979, 0
      %v1015 = vsel %vm810, %v980, 0
      %v1018 = vsel %vm810, %v981, 0
      %v1021 = vsel %vm810, %v982, 0
      %v1024 = vsel %vm810, %v983, 0
      %v1027 = vsel %vm810, %v984, 0
      %v1030 = vsel %vm810, %v985, 0
      %v1033 = vsel %vm810, %v986, 0
      %1035 = vmatprep.subr.mxu0 0.0
      %1036 = vmatpush1.msra.mxu0 0.0
      %1037 = vmatprep.subr.mxu0 0.0
      %1038 = vmatpush1.msra.mxu0 0.0
      %1039 = vmatprep.subr.mxu0 0.0
      %1040 = vmatpush1.msra.mxu0 0.0
      %1041 = vmatprep.subr.mxu0 0.0
      %1042 = vmatpush1.msra.mxu0 0.0
      %1043 = vmatprep.subr.mxu0 0.0
      %1044 = vmatpush1.msra.mxu0 0.0
      %1045 = vmatprep.subr.mxu0 0.0
      %1046 = vmatpush1.msra.mxu0 0.0
      %1047 = vmatprep.subr.mxu0 0.0
      %1048 = vmatpush1.msra.mxu0 0.0
      %1049 = vmatprep.subr.mxu0 0.0
      %1050 = vmatpush1.msra.mxu0 0.0
      %1051 = vmatprep.subr.mxu0 0.0
      %1052 = vmatpush1.msra.mxu0 0.0
      %1053 = vmatprep.subr.mxu0 0.0
      %1054 = vmatpush1.msra.mxu0 0.0
      %1055 = vmatprep.subr.mxu0 0.0
      %1056 = vmatpush1.msra.mxu0 0.0
      %1057 = vmatprep.subr.mxu0 0.0
      %1058 = vmatpush1.msra.mxu0 0.0
      %1059 = vmatprep.subr.mxu0 0.0
      %1060 = vmatpush1.msra.mxu0 %v603
      %1061 = vmatprep.subr.mxu0 0.0
      %1062 = vmatpush1.msra.mxu0 %v602
      %1063 = vmatprep.subr.mxu0 0.0
      %1064 = vmatpush1.msra.mxu0 %v601
      %1065 = vmatprep.subr.mxu0 0.0
      %1066 = vmatpush1.msra.mxu0 %v600
      %1067 = vmatprep.subr.mxu0 0.0
      %1068 = vmatpush2.msra.mxu0 0.0
      %1069 = vmatprep.subr.mxu0 0.0
      %1070 = vmatpush2.msra.mxu0 0.0
      %1071 = vmatprep.subr.mxu0 0.0
      %1072 = vmatpush2.msra.mxu0 0.0
      %1073 = vmatprep.subr.mxu0 0.0
      %1074 = vmatpush2.msra.mxu0 0.0
      %1075 = vmatprep.subr.mxu0 0.0
      %1076 = vmatpush2.msra.mxu0 0.0
      %1077 = vmatprep.subr.mxu0 0.0
      %1078 = vmatpush2.msra.mxu0 0.0
      %1079 = vmatprep.subr.mxu0 0.0
      %1080 = vmatpush2.msra.mxu0 0.0
      %1081 = vmatprep.subr.mxu0 0.0
      %1082 = vmatpush2.msra.mxu0 0.0
      %1083 = vmatprep.subr.mxu0 0.0
      %1084 = vmatpush2.msra.mxu0 0.0
      %1085 = vmatprep.subr.mxu0 0.0
      %1086 = vmatpush2.msra.mxu0 0.0
      %1087 = vmatprep.subr.mxu0 0.0
      %1088 = vmatpush2.msra.mxu0 0.0
      %1089 = vmatprep.subr.mxu0 0.0
      %1090 = vmatpush2.msra.mxu0 0.0
      %1091 = vmatprep.subr.mxu0 0.0
      %1092 = vmatpush2.msra.mxu0 0.0
      %1093 = vmatprep.subr.mxu0 0.0
      %1094 = vmatpush2.msra.mxu0 0.0
      %1095 = vmatprep.subr.mxu0 0.0
      %1096 = vmatpush2.msra.mxu0 0.0
      %1097 = vmatprep.subr.mxu0 0.0
      %1098 = vmatpush2.msra.mxu0 0.0
      %1099 = vmatprep.mubr.f32.mxu0 0.0
      %1100 = vmatmul.mubr.f32.gmra.mxu0 %v988
      %v1101 = vpop.f32.mrf.mxu0
      %v1102 = vadd.f32 0.0, %v1101
      %v1103 = vpop.f32.mrf.mxu0
      %1104 = vmatprep.mubr.f32.mxu0 0.0
      %1105 = vmatmul.mubr.f32.gmra.mxu0 %v991
      %v1106 = vpop.f32.mrf.mxu0
      %v1107 = vadd.f32 0.0, %v1106
      %v1108 = vpop.f32.mrf.mxu0
      %1109 = vmatprep.mubr.f32.mxu0 0.0
      %1110 = vmatmul.mubr.f32.gmra.mxu0 %v994
      %v1111 = vpop.f32.mrf.mxu0
      %v1112 = vadd.f32 0.0, %v1111
      %v1113 = vpop.f32.mrf.mxu0
      %1114 = vmatprep.mubr.f32.mxu0 0.0
      %1115 = vmatmul.mubr.f32.gmra.mxu0 %v997
      %v1116 = vpop.f32.mrf.mxu0
      %v1117 = vadd.f32 0.0, %v1116
      %v1118 = vpop.f32.mrf.mxu0
      %1119 = vmatprep.mubr.f32.mxu0 0.0
      %1120 = vmatmul.mubr.f32.gmra.mxu0 %v1000
      %v1121 = vpop.f32.mrf.mxu0
      %v1122 = vadd.f32 0.0, %v1121
      %v1123 = vpop.f32.mrf.mxu0
      %1124 = vmatprep.mubr.f32.mxu0 0.0
      %1125 = vmatmul.mubr.f32.gmra.mxu0 %v1003
      %v1126 = vpop.f32.mrf.mxu0
      %v1127 = vadd.f32 0.0, %v1126
      %v1128 = vpop.f32.mrf.mxu0
      %1129 = vmatprep.mubr.f32.mxu0 0.0
      %1130 = vmatmul.mubr.f32.gmra.mxu0 %v1006
      %v1131 = vpop.f32.mrf.mxu0
      %v1132 = vadd.f32 0.0, %v1131
      %v1133 = vpop.f32.mrf.mxu0
      %1134 = vmatprep.mubr.f32.mxu0 0.0
      %1135 = vmatmul.mubr.f32.gmra.mxu0 %v1009
      %v1136 = vpop.f32.mrf.mxu0
      %v1137 = vadd.f32 0.0, %v1136
      %v1138 = vpop.f32.mrf.mxu0
      %1139 = vmatprep.mubr.f32.mxu0 0.0
      %1140 = vmatmul.mubr.f32.gmra.mxu0 %v1012
      %v1141 = vpop.f32.mrf.mxu0
      %v1142 = vadd.f32 0.0, %v1141
      %v1143 = vpop.f32.mrf.mxu0
      %1144 = vmatprep.mubr.f32.mxu0 0.0
      %1145 = vmatmul.mubr.f32.gmra.mxu0 %v1015
      %v1146 = vpop.f32.mrf.mxu0
      %v1147 = vadd.f32 0.0, %v1146
      %v1148 = vpop.f32.mrf.mxu0
      %1149 = vmatprep.mubr.f32.mxu0 0.0
      %1150 = vmatmul.mubr.f32.gmra.mxu0 %v1018
      %v1151 = vpop.f32.mrf.mxu0
      %v1152 = vadd.f32 0.0, %v1151
      %v1153 = vpop.f32.mrf.mxu0
      %1154 = vmatprep.mubr.f32.mxu0 0.0
      %1155 = vmatmul.mubr.f32.gmra.mxu0 %v1021
      %v1156 = vpop.f32.mrf.mxu0
      %v1157 = vadd.f32 0.0, %v1156
      %v1158 = vpop.f32.mrf.mxu0
      %1159 = vmatprep.mubr.f32.mxu0 0.0
      %1160 = vmatmul.mubr.f32.gmra.mxu0 %v1024
      %v1161 = vpop.f32.mrf.mxu0
      %v1162 = vadd.f32 0.0, %v1161
      %v1163 = vpop.f32.mrf.mxu0
      %1164 = vmatprep.mubr.f32.mxu0 0.0
      %1165 = vmatmul.mubr.f32.gmra.mxu0 %v1027
      %v1166 = vpop.f32.mrf.mxu0
      %v1167 = vadd.f32 0.0, %v1166
      %v1168 = vpop.f32.mrf.mxu0
      %1169 = vmatprep.mubr.f32.mxu0 0.0
      %1170 = vmatmul.mubr.f32.gmra.mxu0 %v1030
      %v1171 = vpop.f32.mrf.mxu0
      %v1172 = vadd.f32 0.0, %v1171
      %v1173 = vpop.f32.mrf.mxu0
      %1174 = vmatprep.mubr.f32.mxu0 0.0
      %1175 = vmatmul.mubr.f32.gmra.mxu0 %v1033
      %v1176 = vpop.f32.mrf.mxu0
      %v1177 = vadd.f32 0.0, %v1176
      %v1178 = vpop.f32.mrf.mxu0
      %1179 = vdwg.mxu0
      %v1180 = vld [vmem:[%s5] sm:$0xff]
      %v1181 = vld [vmem:[%s5 + $0x8] sm:$0xff]
      %v1182 = vld [vmem:[%s5 + $0x10] sm:$0xff]
      %v1183 = vld [vmem:[%s5 + $0x18] sm:$0xff]
      %v1184 = vld [vmem:[%s5 + $0x20] sm:$0xff]
      %v1185 = vld [vmem:[%s5 + $0x28] sm:$0xff]
      %v1186 = vld [vmem:[%s5 + $0x30] sm:$0xff]
      %v1187 = vld [vmem:[%s5 + $0x38] sm:$0xff]
      %v1188 = vld [vmem:[%s6] sm:$0x1]
      %v1190 = vlaneseq
      %v1191 = vshrl.u32 %v1190, 7
      %v1192 = vsub.s32 0, %v1191
      %v1193 = vrot.slane %v1188, %v1192
      %v1196 = vsel %vm604, %v1102, 0
      %v1199 = vsel %vm604, %v1107, 0
      %v1202 = vsel %vm604, %v1112, 0
      %v1205 = vsel %vm604, %v1117, 0
      %v1208 = vsel %vm604, %v1122, 0
      %v1211 = vsel %vm604, %v1127, 0
      %v1214 = vsel %vm604, %v1132, 0
      %v1217 = vsel %vm604, %v1137, 0
      %v1220 = vsel %vm604, %v1142, 0
      %v1223 = vsel %vm604, %v1147, 0
      %v1226 = vsel %vm604, %v1152, 0
      %v1229 = vsel %vm604, %v1157, 0
      %v1232 = vsel %vm604, %v1162, 0
      %v1235 = vsel %vm604, %v1167, 0
      %v1238 = vsel %vm604, %v1172, 0
      %v1241 = vsel %vm604, %v1177, 0
      %1243 = vmatprep.subr.mxu0 0.0
      %1244 = vmatpush1.msra.mxu0 0.0
      %1245 = vmatprep.subr.mxu0 0.0
      %1246 = vmatpush1.msra.mxu0 0.0
      %1247 = vmatprep.subr.mxu0 0.0
      %1248 = vmatpush1.msra.mxu0 0.0
      %1249 = vmatprep.subr.mxu0 0.0
      %1250 = vmatpush1.msra.mxu0 0.0
      %1251 = vmatprep.subr.mxu0 0.0
      %1252 = vmatpush1.msra.mxu0 0.0
      %1253 = vmatprep.subr.mxu0 0.0
      %1254 = vmatpush1.msra.mxu0 0.0
      %1255 = vmatprep.subr.mxu0 0.0
      %1256 = vmatpush1.msra.mxu0 0.0
      %1257 = vmatprep.subr.mxu0 0.0
      %1258 = vmatpush1.msra.mxu0 0.0
      %1259 = vmatprep.subr.mxu0 0.0
      %1260 = vmatpush1.msra.mxu0 %v1187
      %1261 = vmatprep.subr.mxu0 0.0
      %1262 = vmatpush1.msra.mxu0 %v1186
      %1263 = vmatprep.subr.mxu0 0.0
      %1264 = vmatpush1.msra.mxu0 %v1185
      %1265 = vmatprep.subr.mxu0 0.0
      %1266 = vmatpush1.msra.mxu0 %v1184
      %1267 = vmatprep.subr.mxu0 0.0
      %1268 = vmatpush1.msra.mxu0 %v1183
      %1269 = vmatprep.subr.mxu0 0.0
      %1270 = vmatpush1.msra.mxu0 %v1182
      %1271 = vmatprep.subr.mxu0 0.0
      %1272 = vmatpush1.msra.mxu0 %v1181
      %1273 = vmatprep.subr.mxu0 0.0
      %1274 = vmatpush1.msra.mxu0 %v1180
      %1275 = vmatprep.subr.mxu0 0.0
      %1276 = vmatpush2.msra.mxu0 0.0
      %1277 = vmatprep.subr.mxu0 0.0
      %1278 = vmatpush2.msra.mxu0 0.0
      %1279 = vmatprep.subr.mxu0 0.0
      %1280 = vmatpush2.msra.mxu0 0.0
      %1281 = vmatprep.subr.mxu0 0.0
      %1282 = vmatpush2.msra.mxu0 0.0
      %1283 = vmatprep.subr.mxu0 0.0
      %1284 = vmatpush2.msra.mxu0 0.0
      %1285 = vmatprep.subr.mxu0 0.0
      %1286 = vmatpush2.msra.mxu0 0.0
      %1287 = vmatprep.subr.mxu0 0.0
      %1288 = vmatpush2.msra.mxu0 0.0
      %1289 = vmatprep.subr.mxu0 0.0
      %1290 = vmatpush2.msra.mxu0 0.0
      %1291 = vmatprep.subr.mxu0 0.0
      %1292 = vmatpush2.msra.mxu0 0.0
      %1293 = vmatprep.subr.mxu0 0.0
      %1294 = vmatpush2.msra.mxu0 0.0
      %1295 = vmatprep.subr.mxu0 0.0
      %1296 = vmatpush2.msra.mxu0 0.0
      %1297 = vmatprep.subr.mxu0 0.0
      %1298 = vmatpush2.msra.mxu0 0.0
      %1299 = vmatprep.subr.mxu0 0.0
      %1300 = vmatpush2.msra.mxu0 0.0
      %1301 = vmatprep.subr.mxu0 0.0
      %1302 = vmatpush2.msra.mxu0 0.0
      %1303 = vmatprep.subr.mxu0 0.0
      %1304 = vmatpush2.msra.mxu0 0.0
      %1305 = vmatprep.subr.mxu0 0.0
      %1306 = vmatpush2.msra.mxu0 0.0
      %1307 = vmatprep.mubr.f32.mxu0 0.0
      %1308 = vmatmul.mubr.f32.gmra.mxu0 %v1196
      %v1309 = vpop.f32.mrf.mxu0
      %v1310 = vadd.f32 %v1193, %v1309
      %v1311 = vpop.f32.mrf.mxu0
      %1312 = vmatprep.mubr.f32.mxu0 0.0
      %1313 = vmatmul.mubr.f32.gmra.mxu0 %v1199
      %v1314 = vpop.f32.mrf.mxu0
      %v1315 = vadd.f32 %v1193, %v1314
      %v1316 = vpop.f32.mrf.mxu0
      %1317 = vmatprep.mubr.f32.mxu0 0.0
      %1318 = vmatmul.mubr.f32.gmra.mxu0 %v1202
      %v1319 = vpop.f32.mrf.mxu0
      %v1320 = vadd.f32 %v1193, %v1319
      %v1321 = vpop.f32.mrf.mxu0
      %1322 = vmatprep.mubr.f32.mxu0 0.0
      %1323 = vmatmul.mubr.f32.gmra.mxu0 %v1205
      %v1324 = vpop.f32.mrf.mxu0
      %v1325 = vadd.f32 %v1193, %v1324
      %v1326 = vpop.f32.mrf.mxu0
      %1327 = vmatprep.mubr.f32.mxu0 0.0
      %1328 = vmatmul.mubr.f32.gmra.mxu0 %v1208
      %v1329 = vpop.f32.mrf.mxu0
      %v1330 = vadd.f32 %v1193, %v1329
      %v1331 = vpop.f32.mrf.mxu0
      %1332 = vmatprep.mubr.f32.mxu0 0.0
      %1333 = vmatmul.mubr.f32.gmra.mxu0 %v1211
      %v1334 = vpop.f32.mrf.mxu0
      %v1335 = vadd.f32 %v1193, %v1334
      %v1336 = vpop.f32.mrf.mxu0
      %1337 = vmatprep.mubr.f32.mxu0 0.0
      %1338 = vmatmul.mubr.f32.gmra.mxu0 %v1214
      %v1339 = vpop.f32.mrf.mxu0
      %v1340 = vadd.f32 %v1193, %v1339
      %v1341 = vpop.f32.mrf.mxu0
      %1342 = vmatprep.mubr.f32.mxu0 0.0
      %1343 = vmatmul.mubr.f32.gmra.mxu0 %v1217
      %v1344 = vpop.f32.mrf.mxu0
      %v1345 = vadd.f32 %v1193, %v1344
      %v1346 = vpop.f32.mrf.mxu0
      %1347 = vmatprep.mubr.f32.mxu0 0.0
      %1348 = vmatmul.mubr.f32.gmra.mxu0 %v1220
      %v1349 = vpop.f32.mrf.mxu0
      %v1350 = vadd.f32 %v1193, %v1349
      %v1351 = vpop.f32.mrf.mxu0
      %1352 = vmatprep.mubr.f32.mxu0 0.0
      %1353 = vmatmul.mubr.f32.gmra.mxu0 %v1223
      %v1354 = vpop.f32.mrf.mxu0
      %v1355 = vadd.f32 %v1193, %v1354
      %v1356 = vpop.f32.mrf.mxu0
      %1357 = vmatprep.mubr.f32.mxu0 0.0
      %1358 = vmatmul.mubr.f32.gmra.mxu0 %v1226
      %v1359 = vpop.f32.mrf.mxu0
      %v1360 = vadd.f32 %v1193, %v1359
      %v1361 = vpop.f32.mrf.mxu0
      %1362 = vmatprep.mubr.f32.mxu0 0.0
      %1363 = vmatmul.mubr.f32.gmra.mxu0 %v1229
      %v1364 = vpop.f32.mrf.mxu0
      %v1365 = vadd.f32 %v1193, %v1364
      %v1366 = vpop.f32.mrf.mxu0
      %1367 = vmatprep.mubr.f32.mxu0 0.0
      %1368 = vmatmul.mubr.f32.gmra.mxu0 %v1232
      %v1369 = vpop.f32.mrf.mxu0
      %v1370 = vadd.f32 %v1193, %v1369
      %v1371 = vpop.f32.mrf.mxu0
      %1372 = vmatprep.mubr.f32.mxu0 0.0
      %1373 = vmatmul.mubr.f32.gmra.mxu0 %v1235
      %v1374 = vpop.f32.mrf.mxu0
      %v1375 = vadd.f32 %v1193, %v1374
      %v1376 = vpop.f32.mrf.mxu0
      %1377 = vmatprep.mubr.f32.mxu0 0.0
      %1378 = vmatmul.mubr.f32.gmra.mxu0 %v1238
      %v1379 = vpop.f32.mrf.mxu0
      %v1380 = vadd.f32 %v1193, %v1379
      %v1381 = vpop.f32.mrf.mxu0
      %1382 = vmatprep.mubr.f32.mxu0 0.0
      %1383 = vmatmul.mubr.f32.gmra.mxu0 %v1241
      %v1384 = vpop.f32.mrf.mxu0
      %v1385 = vadd.f32 %v1193, %v1384
      %v1386 = vpop.f32.mrf.mxu0
      %1387 = vdwg.mxu0
      %v1388 = vld [vmem:[%s7] sm:$0x1]
      %v1390 = vlaneseq
      %v1391 = vshrl.u32 %v1390, 7
      %v1392 = vsub.s32 0, %v1391
      %v1393 = vrot.slane %v1388, %v1392
      %v1395 = vmul.f32 %v1310, %v1393
      %v1396 = vmul.f32 %v1315, %v1393
      %v1397 = vmul.f32 %v1320, %v1393
      %v1398 = vmul.f32 %v1325, %v1393
      %v1399 = vmul.f32 %v1330, %v1393
      %v1400 = vmul.f32 %v1335, %v1393
      %v1401 = vmul.f32 %v1340, %v1393
      %v1402 = vmul.f32 %v1345, %v1393
      %v1403 = vmul.f32 %v1350, %v1393
      %v1404 = vmul.f32 %v1355, %v1393
      %v1405 = vmul.f32 %v1360, %v1393
      %v1406 = vmul.f32 %v1365, %v1393
      %v1407 = vmul.f32 %v1370, %v1393
      %v1408 = vmul.f32 %v1375, %v1393
      %v1409 = vmul.f32 %v1380, %v1393
      %v1410 = vmul.f32 %v1385, %v1393
      %v1411 = vld [vmem:[%s8] sm:$0x1]
      %v1413 = vlaneseq
      %v1414 = vshrl.u32 %v1413, 7
      %v1415 = vsub.s32 0, %v1414
      %v1416 = vrot.slane %v1411, %v1415
      %v1418 = vadd.f32 %v1395, %v1416
      %v1419 = vadd.f32 %v1396, %v1416
      %v1420 = vadd.f32 %v1397, %v1416
      %v1421 = vadd.f32 %v1398, %v1416
      %v1422 = vadd.f32 %v1399, %v1416
      %v1423 = vadd.f32 %v1400, %v1416
      %v1424 = vadd.f32 %v1401, %v1416
      %v1425 = vadd.f32 %v1402, %v1416
      %v1426 = vadd.f32 %v1403, %v1416
      %v1427 = vadd.f32 %v1404, %v1416
      %v1428 = vadd.f32 %v1405, %v1416
      %v1429 = vadd.f32 %v1406, %v1416
      %v1430 = vadd.f32 %v1407, %v1416
      %v1431 = vadd.f32 %v1408, %v1416
      %v1432 = vadd.f32 %v1409, %v1416
      %v1433 = vadd.f32 %v1410, %v1416
      %v1434 = vadd.f32 %v1418, %v412
      %v1435 = vadd.f32 %v1419, %v413
      %v1436 = vadd.f32 %v1420, %v414
      %v1437 = vadd.f32 %v1421, %v415
      %v1438 = vadd.f32 %v1422, %v416
      %v1439 = vadd.f32 %v1423, %v417
      %v1440 = vadd.f32 %v1424, %v418
      %v1441 = vadd.f32 %v1425, %v419
      %v1442 = vadd.f32 %v1426, %v420
      %v1443 = vadd.f32 %v1427, %v421
      %v1444 = vadd.f32 %v1428, %v422
      %v1445 = vadd.f32 %v1429, %v423
      %v1446 = vadd.f32 %v1430, %v424
      %v1447 = vadd.f32 %v1431, %v425
      %v1448 = vadd.f32 %v1432, %v426
      %v1449 = vadd.f32 %v1433, %v427
      %1450 = vst [vmem:[%s410] sm:$0xff] %v1434
      %1451 = vst [vmem:[%s410 + $0x8] sm:$0xff] %v1435
      %1452 = vst [vmem:[%s410 + $0x10] sm:$0xff] %v1436
      %1453 = vst [vmem:[%s410 + $0x18] sm:$0xff] %v1437
      %1454 = vst [vmem:[%s410 + $0x20] sm:$0xff] %v1438
      %1455 = vst [vmem:[%s410 + $0x28] sm:$0xff] %v1439
      %1456 = vst [vmem:[%s410 + $0x30] sm:$0xff] %v1440
      %1457 = vst [vmem:[%s410 + $0x38] sm:$0xff] %v1441
      %1458 = vst [vmem:[%s410 + $0x40] sm:$0xff] %v1442
      %1459 = vst [vmem:[%s410 + $0x48] sm:$0xff] %v1443
      %1460 = vst [vmem:[%s410 + $0x50] sm:$0xff] %v1444
      %1461 = vst [vmem:[%s410 + $0x58] sm:$0xff] %v1445
      %1462 = vst [vmem:[%s410 + $0x60] sm:$0xff] %v1446
      %1463 = vst [vmem:[%s410 + $0x68] sm:$0xff] %v1447
      %1464 = vst [vmem:[%s410 + $0x70] sm:$0xff] %v1448
      %1465 = vst [vmem:[%s410 + $0x78] sm:$0xff] %v1449
      %s1466 = smul.u32 16, %s25
      %p1467 = scmp.lt.s32.totalorder %s24, 1
      %s1468 = scalar_select %p1467, %s24, 1
      %p1469 = scmp.lt.s32.totalorder %s1466, 31
      %s1470 = scalar_select %p1469, %s1466, 31
      %s1471 = smul.addr %s1468, 32
      %s1472 = sadd.s32 %s1470, %s1471
      %s1473 = smul.addr %s1472, 8
      %s1474 = scalar_lea.vmem %s9, %s1473
      // Predicated region
      $region57: #{context_voted_forward.3} parent=55 // pred_check
        %p1475 = pneg %p258
      $region58: #{context_voted_forward.3} parent=55 // pred_check_branch
        %1477 = sbr.rel (%p1475) target = $region60
      $region59: #{context_voted_forward.3} parent=55 // pred_region
        %s1478 = smul.u32 16, %s25
      $region60: #{context_voted_forward.3} parent=55 // pred_fallthru
        _
    $region56: #{context_voted_forward.3} parent=5 // pred_fallthru
      _
    %p1479 = scmp.le.s32.totalorder 2, %s15
    // Predicated region
    $region61: #{context_voted_forward.3} parent=5 // pred_check
      %p1480 = pneg %p1479
    $region62: #{context_voted_forward.3} parent=5 // pred_check_branch
      %1482 = sbr.rel (%p1480) target = $region64
    $region63: #{context_voted_forward.3} parent=5 // pred_region
      %s1483 = ssub.s32 %s15, 2
      // Predicated region
      $region65: #{context_voted_forward.3} parent=63 // pred_check
        %p1484 = pneg %p264
      $region66: #{context_voted_forward.3} parent=63 // pred_check_branch
        %1486 = sbr.rel (%p1484) target = $region68
      $region67: #{context_voted_forward.3} parent=63 // pred_region
        %s1487 = smul.u32 16, %s27
        %p1488 = scmp.lt.s32.totalorder %s26, 1
        %s1489 = scalar_select %p1488, %s26, 1
        %p1490 = scmp.lt.s32.totalorder %s1487, 31
        %s1491 = scalar_select %p1490, %s1487, 31
        %s1492 = smul.addr %s1489, 32
        %s1493 = sadd.s32 %s1491, %s1492
        %s1494 = smul.addr %s1493, 8
        %s1495 = scalar_lea.vmem %s9, %s1494
      $region68: #{context_voted_forward.3} parent=63 // pred_fallthru
        _
    $region64: #{context_voted_forward.3} parent=5 // pred_fallthru
      _
  $region6: #{context_voted_forward.3} parent=0 // loop_footer
    %s19 = sadd.s32 1, %s15
  $region7: #{context_voted_forward.3} parent=0 // loop_footer_branch
    %14 = sbr.rel target = $region3
  $region8: #{context_voted_forward.3} parent=0 // loop_exit
    _

</llo_original>
